<compile_context>
chip_gen: v7x
topology: tpu7x:2x2x1
jax: 0.10.0
libtpu: 0.0.40
codegen_flags: <defaults>
</compile_context>

<pallas_src>
import functools

import jax
import jax.numpy as jnp
from jax import lax
from jax.experimental import pallas as pl
from jax.experimental.pallas import tpu as pltpu

_LANE = 128


# --------------------------------------------------------------------------- #
# Fused kernel: gdep propagation steps + 1x1 conv, all resident in VMEM.
#   a_ref : (N, N)            row-normalized adjacency (VMEM, constant block)
#   x_ref : (C, N, tcols)     node-major column tile of the input
#   w_ref : (C_out, (gdep+1)*C)  conv weight in SMEM (scalar reads)
#   b_ref : (C_out,)          conv bias in SMEM
#   o_ref : (C_out, N, tcols) output tile (lane-dense on the column axis)
# --------------------------------------------------------------------------- #
def _mixprop_fused_kernel(a_ref, x_ref, w_ref, b_ref, o_ref, *,
                          alpha, gdep, c_in, c_out, compute_dtype):
    a = a_ref[...].astype(compute_dtype)             # (N, N)
    x = [x_ref[c] for c in range(c_in)]              # c_in slabs of (N, tcols) f32
    h = list(x)                                      # propagation level 0
    acc = [None] * c_out                             # conv accumulators (f32)

    # gdep / c_in / c_out are small static ints -> fully unrolled (LLO-visible).
    for level in range(gdep + 1):
        # 1x1-conv contribution of this level. Channel index k = level*c_in + c
        # matches torch.cat(out, dim=1) ordering. K and C_out are tiny, so this
        # stays on the VPU with SMEM scalar weights (no MXU benefit possible).
        for c in range(c_in):
            hc = h[c]
            for o in range(c_out):
                term = w_ref[o, level * c_in + c] * hc
                acc[o] = term if acc[o] is None else acc[o] + term
        # Propagate to the next level: h <- alpha*x + (1-alpha) * a @ h
        if level < gdep:
            for c in range(c_in):
                prop = jnp.dot(a, h[c].astype(compute_dtype),
                               preferred_element_type=jnp.float32)
                h[c] = alpha * x[c] + (1.0 - alpha) * prop

    for o in range(c_out):
        o_ref[o] = (acc[o] + b_ref[o]).astype(o_ref.dtype)


# --------------------------------------------------------------------------- #
# VMEM-budget-driven tiling of the flattened B*L column axis.
# --------------------------------------------------------------------------- #
def _plan_columns(m, col_bytes, col_budget_bytes):
    """Return (padded_m, tile_cols).

    tile_cols * col_bytes stays under the budget when possible, tile_cols is a
    multiple of 128 (lane width) unless it covers the whole (small) axis, and
    >= 2 grid steps are preferred so v7x's two TensorCores both get work.
    Budget-driven, not divisibility-driven: the column axis is padded host-side.
    """
    if m <= _LANE:
        return m, m                                   # tiny: one full-width tile
    mp = -(-m // _LANE) * _LANE                       # round up to lane multiple
    cap_cols = max(_LANE, int(col_budget_bytes) // max(int(col_bytes), 1))
    divs = [t for t in range(_LANE, mp + 1, _LANE) if mp % t == 0 and t <= cap_cols]
    if not divs:
        return mp, _LANE                              # floor: one lane-width tile
    multi = [t for t in divs if mp // t >= 2]
    return mp, (max(multi) if multi else max(divs))


def mixprop_forward(x, adj, w, b, *, gdep, alpha,
                    compute_dtype=jnp.float32,
                    vmem_budget_bytes=24 * 1024 * 1024,
                    vmem_limit_bytes=48 * 1024 * 1024):
    """x: (B, C, N, L) f32; adj: (N, N); w: (C_out, (gdep+1)*C); b: (C_out,).

    Returns (B, C_out, N, L) float32, matching mixprop.forward.
    Assumes the (N, N) adjacency plus one column slab fit in VMEM.
    """
    B, C, N, L = x.shape
    C_out, K = w.shape
    assert K == (gdep + 1) * C, "weight shape must be (c_out, (gdep+1)*c_in)"

    # Host side (tiny, N*N): adj + I and row normalization, hoisted out of the
    # kernel so it is not recomputed per grid step (and no pl.when(pid==0)
    # trick, which would break under v7x megacore sharding). deg >= 1 as long
    # as adj is non-negative -- same assumption as the PyTorch module.
    adjn = adj.astype(jnp.float32) + jnp.eye(N, dtype=jnp.float32)
    a = adjn / jnp.sum(adjn, axis=1, keepdims=True)

    # Node-major layout (C, N, B*L): every propagation step is a plain a @ h
    # 2-D MXU dot per channel, and the (depth, channel) conv contraction never
    # leaves the column tile, so only x and out cross HBM.
    M = B * L
    xp = jnp.transpose(x, (1, 2, 0, 3)).reshape(C, N, M).astype(jnp.float32)

    # Per-column f32 VMEM footprint: double-buffered x block (2*C*N) +
    # double-buffered out block (2*C_out*N) + live h values (C*N) + live conv
    # accumulators (C_out*N) + one dot temporary (N).
    col_bytes = 4 * N * (3 * C + 3 * C_out + 1)
    # `a` has a constant index_map but is still double-buffered by default;
    # account for it in the budget instead of risking pipeline_mode tweaks.
    adj_bytes = 2 * 4 * N * N
    Mp, tcols = _plan_columns(M, col_bytes, max(vmem_budget_bytes - adj_bytes, 0))
    if Mp != M:
        xp = jnp.pad(xp, ((0, 0), (0, 0), (0, Mp - M)))

    kernel = functools.partial(
        _mixprop_fused_kernel, alpha=float(alpha), gdep=int(gdep),
        c_in=int(C), c_out=int(C_out), compute_dtype=compute_dtype)

    out = pl.pallas_call(
        kernel,
        out_shape=jax.ShapeDtypeStruct((C_out, N, Mp), jnp.float32),
        grid=(Mp // tcols,),
        in_specs=[
            pl.BlockSpec((N, N), lambda j: (0, 0)),             # normalized adjacency
            pl.BlockSpec((C, N, tcols), lambda j: (0, 0, j)),   # x column tile
            pl.BlockSpec(memory_space=pltpu.MemorySpace.SMEM),  # conv weight (scalars)
            pl.BlockSpec(memory_space=pltpu.MemorySpace.SMEM),  # conv bias (scalars)
        ],
        out_specs=pl.BlockSpec((C_out, N, tcols), lambda j: (0, 0, j)),
        compiler_params=pltpu.CompilerParams(
            dimension_semantics=("parallel",),
            vmem_limit_bytes=int(vmem_limit_bytes)),
    )(a, xp, w.astype(jnp.float32), b.astype(jnp.float32))

    out = out[:, :, :M]                                  # drop column padding
    return jnp.transpose(out.reshape(C_out, N, B, L), (2, 0, 1, 3))


# --------------------------------------------------------------------------- #
# Pure-JAX reference mirroring the PyTorch module.
# --------------------------------------------------------------------------- #
def _reference(x, adj, w, b, *, gdep, alpha):
    n = adj.shape[0]
    adjn = adj + jnp.eye(n, dtype=x.dtype)
    d = adjn.sum(axis=1)
    a = adjn / d[:, None]
    h = x
    outs = [h]
    for _ in range(gdep):
        h = alpha * x + (1.0 - alpha) * jnp.einsum(
            "ncwl,vw->ncvl", h, a, precision=lax.Precision.HIGHEST)
        outs.append(h)
    ho = jnp.concatenate(outs, axis=1)
    ho = jnp.einsum("nkvl,ok->novl", ho, w,
                    precision=lax.Precision.HIGHEST) + b[None, :, None, None]
    return ho


if __name__ == "__main__":
    # Small shapes consistent with the module:
    # x: (batch, c_in, n_nodes, seq_len); adj: (n_nodes, n_nodes)
    B, C_in, N, L = 2, 4, 16, 8
    C_out, gdep, alpha = 8, 2, 0.05

    key = jax.random.PRNGKey(0)
    kx, ka, kw, kb = jax.random.split(key, 4)
    x = jax.random.normal(kx, (B, C_in, N, L), jnp.float32)
    adj = jax.random.uniform(ka, (N, N), jnp.float32)     # non-negative adjacency
    # 1x1-conv weight (C_out, (gdep+1)*C_in) and bias (C_out,)
    w = jax.random.normal(kw, (C_out, (gdep + 1) * C_in), jnp.float32) * 0.1
    b = jax.random.normal(kb, (C_out,), jnp.float32) * 0.1

    out = mixprop_forward(x, adj, w, b, gdep=gdep, alpha=alpha)
    out = jax.block_until_ready(out)

    ref = jax.block_until_ready(_reference(x, adj, w, b, gdep=gdep, alpha=alpha))
    assert out.shape == (B, C_out, N, L)
    if not jnp.allclose(out, ref, atol=1e-4, rtol=1e-4):
        err = float(jnp.max(jnp.abs(out - ref)))
        raise AssertionError(
            f"Pallas mixprop output does not match JAX reference (max abs err {err:.3e})")

    print("KERNEL_OK")
</pallas_src>

<mosaic_0001>
module attributes {stable_mosaic.version = 11 : i64} {
  func.func @_mixprop_fused_kernel(%arg0: i32, %arg1: memref<16x16xf32, #tpu.memory_space<vmem>>, %arg2: memref<4x16x16xf32, #tpu.memory_space<vmem>>, %arg3: memref<8x12xf32, #tpu.memory_space<smem>>, %arg4: memref<8xf32, #tpu.memory_space<smem>>, %arg5: memref<8x16x16xf32, #tpu.memory_space<vmem>>) attributes {dimension_semantics = [#tpu.dimension_semantics<parallel>], iteration_bounds = array<i64: 1>, scalar_prefetch = 0 : i64, scratch_operands = 0 : i64, tpu.core_type = #tpu.core_type<tc>, window_params = [{pipeline_mode = #tpu.pipeline_mode<synchronous>, transform_indices = @transform_0, window_bounds = array<i64: 16, 16>}, {transform_indices = @transform_1, window_bounds = array<i64: 4, 16, 16>}, {transform_indices = @transform_2, window_bounds = array<i64: 8, 12>}, {transform_indices = @transform_3, window_bounds = array<i64: 8>}, {transform_indices = @transform_4, window_bounds = array<i64: 8, 16, 16>}]} {
    %c0 = arith.constant 0 : index
    %c0_0 = arith.constant 0 : index
    %0 = vector.load %arg1[%c0, %c0_0] : memref<16x16xf32, #tpu.memory_space<vmem>>, vector<16x16xf32>
    %c0_1 = arith.constant 0 : index
    %c0_2 = arith.constant 0 : index
    %c0_3 = arith.constant 0 : index
    %1 = vector.load %arg2[%c0_1, %c0_2, %c0_3] : memref<4x16x16xf32, #tpu.memory_space<vmem>>, vector<1x16x16xf32>
    %2 = vector.shape_cast %1 : vector<1x16x16xf32> to vector<16x16xf32>
    %c1 = arith.constant 1 : index
    %c0_4 = arith.constant 0 : index
    %c0_5 = arith.constant 0 : index
    %3 = vector.load %arg2[%c1, %c0_4, %c0_5] : memref<4x16x16xf32, #tpu.memory_space<vmem>>, vector<1x16x16xf32>
    %4 = vector.shape_cast %3 : vector<1x16x16xf32> to vector<16x16xf32>
    %c2 = arith.constant 2 : index
    %c0_6 = arith.constant 0 : index
    %c0_7 = arith.constant 0 : index
    %5 = vector.load %arg2[%c2, %c0_6, %c0_7] : memref<4x16x16xf32, #tpu.memory_space<vmem>>, vector<1x16x16xf32>
    %6 = vector.shape_cast %5 : vector<1x16x16xf32> to vector<16x16xf32>
    %c3 = arith.constant 3 : index
    %c0_8 = arith.constant 0 : index
    %c0_9 = arith.constant 0 : index
    %7 = vector.load %arg2[%c3, %c0_8, %c0_9] : memref<4x16x16xf32, #tpu.memory_space<vmem>>, vector<1x16x16xf32>
    %8 = vector.shape_cast %7 : vector<1x16x16xf32> to vector<16x16xf32>
    %c0_10 = arith.constant 0 : index
    %c0_11 = arith.constant 0 : index
    %9 = memref.load %arg3[%c0_10, %c0_11] : memref<8x12xf32, #tpu.memory_space<smem>>
    %10 = vector.broadcast %9 : f32 to vector<16x16xf32>
    %11 = arith.mulf %10, %2 : vector<16x16xf32>
    %c1_12 = arith.constant 1 : index
    %c0_13 = arith.constant 0 : index
    %12 = memref.load %arg3[%c1_12, %c0_13] : memref<8x12xf32, #tpu.memory_space<smem>>
    %13 = vector.broadcast %12 : f32 to vector<16x16xf32>
    %14 = arith.mulf %13, %2 : vector<16x16xf32>
    %c2_14 = arith.constant 2 : index
    %c0_15 = arith.constant 0 : index
    %15 = memref.load %arg3[%c2_14, %c0_15] : memref<8x12xf32, #tpu.memory_space<smem>>
    %16 = vector.broadcast %15 : f32 to vector<16x16xf32>
    %17 = arith.mulf %16, %2 : vector<16x16xf32>
    %c3_16 = arith.constant 3 : index
    %c0_17 = arith.constant 0 : index
    %18 = memref.load %arg3[%c3_16, %c0_17] : memref<8x12xf32, #tpu.memory_space<smem>>
    %19 = vector.broadcast %18 : f32 to vector<16x16xf32>
    %20 = arith.mulf %19, %2 : vector<16x16xf32>
    %c4 = arith.constant 4 : index
    %c0_18 = arith.constant 0 : index
    %21 = memref.load %arg3[%c4, %c0_18] : memref<8x12xf32, #tpu.memory_space<smem>>
    %22 = vector.broadcast %21 : f32 to vector<16x16xf32>
    %23 = arith.mulf %22, %2 : vector<16x16xf32>
    %c5 = arith.constant 5 : index
    %c0_19 = arith.constant 0 : index
    %24 = memref.load %arg3[%c5, %c0_19] : memref<8x12xf32, #tpu.memory_space<smem>>
    %25 = vector.broadcast %24 : f32 to vector<16x16xf32>
    %26 = arith.mulf %25, %2 : vector<16x16xf32>
    %c6 = arith.constant 6 : index
    %c0_20 = arith.constant 0 : index
    %27 = memref.load %arg3[%c6, %c0_20] : memref<8x12xf32, #tpu.memory_space<smem>>
    %28 = vector.broadcast %27 : f32 to vector<16x16xf32>
    %29 = arith.mulf %28, %2 : vector<16x16xf32>
    %c7 = arith.constant 7 : index
    %c0_21 = arith.constant 0 : index
    %30 = memref.load %arg3[%c7, %c0_21] : memref<8x12xf32, #tpu.memory_space<smem>>
    %31 = vector.broadcast %30 : f32 to vector<16x16xf32>
    %32 = arith.mulf %31, %2 : vector<16x16xf32>
    %c0_22 = arith.constant 0 : index
    %c1_23 = arith.constant 1 : index
    %33 = memref.load %arg3[%c0_22, %c1_23] : memref<8x12xf32, #tpu.memory_space<smem>>
    %34 = vector.broadcast %33 : f32 to vector<16x16xf32>
    %35 = arith.mulf %34, %4 : vector<16x16xf32>
    %36 = arith.addf %11, %35 : vector<16x16xf32>
    %c1_24 = arith.constant 1 : index
    %c1_25 = arith.constant 1 : index
    %37 = memref.load %arg3[%c1_24, %c1_25] : memref<8x12xf32, #tpu.memory_space<smem>>
    %38 = vector.broadcast %37 : f32 to vector<16x16xf32>
    %39 = arith.mulf %38, %4 : vector<16x16xf32>
    %40 = arith.addf %14, %39 : vector<16x16xf32>
    %c2_26 = arith.constant 2 : index
    %c1_27 = arith.constant 1 : index
    %41 = memref.load %arg3[%c2_26, %c1_27] : memref<8x12xf32, #tpu.memory_space<smem>>
    %42 = vector.broadcast %41 : f32 to vector<16x16xf32>
    %43 = arith.mulf %42, %4 : vector<16x16xf32>
    %44 = arith.addf %17, %43 : vector<16x16xf32>
    %c3_28 = arith.constant 3 : index
    %c1_29 = arith.constant 1 : index
    %45 = memref.load %arg3[%c3_28, %c1_29] : memref<8x12xf32, #tpu.memory_space<smem>>
    %46 = vector.broadcast %45 : f32 to vector<16x16xf32>
    %47 = arith.mulf %46, %4 : vector<16x16xf32>
    %48 = arith.addf %20, %47 : vector<16x16xf32>
    %c4_30 = arith.constant 4 : index
    %c1_31 = arith.constant 1 : index
    %49 = memref.load %arg3[%c4_30, %c1_31] : memref<8x12xf32, #tpu.memory_space<smem>>
    %50 = vector.broadcast %49 : f32 to vector<16x16xf32>
    %51 = arith.mulf %50, %4 : vector<16x16xf32>
    %52 = arith.addf %23, %51 : vector<16x16xf32>
    %c5_32 = arith.constant 5 : index
    %c1_33 = arith.constant 1 : index
    %53 = memref.load %arg3[%c5_32, %c1_33] : memref<8x12xf32, #tpu.memory_space<smem>>
    %54 = vector.broadcast %53 : f32 to vector<16x16xf32>
    %55 = arith.mulf %54, %4 : vector<16x16xf32>
    %56 = arith.addf %26, %55 : vector<16x16xf32>
    %c6_34 = arith.constant 6 : index
    %c1_35 = arith.constant 1 : index
    %57 = memref.load %arg3[%c6_34, %c1_35] : memref<8x12xf32, #tpu.memory_space<smem>>
    %58 = vector.broadcast %57 : f32 to vector<16x16xf32>
    %59 = arith.mulf %58, %4 : vector<16x16xf32>
    %60 = arith.addf %29, %59 : vector<16x16xf32>
    %c7_36 = arith.constant 7 : index
    %c1_37 = arith.constant 1 : index
    %61 = memref.load %arg3[%c7_36, %c1_37] : memref<8x12xf32, #tpu.memory_space<smem>>
    %62 = vector.broadcast %61 : f32 to vector<16x16xf32>
    %63 = arith.mulf %62, %4 : vector<16x16xf32>
    %64 = arith.addf %32, %63 : vector<16x16xf32>
    %c0_38 = arith.constant 0 : index
    %c2_39 = arith.constant 2 : index
    %65 = memref.load %arg3[%c0_38, %c2_39] : memref<8x12xf32, #tpu.memory_space<smem>>
    %66 = vector.broadcast %65 : f32 to vector<16x16xf32>
    %67 = arith.mulf %66, %6 : vector<16x16xf32>
    %68 = arith.addf %36, %67 : vector<16x16xf32>
    %c1_40 = arith.constant 1 : index
    %c2_41 = arith.constant 2 : index
    %69 = memref.load %arg3[%c1_40, %c2_41] : memref<8x12xf32, #tpu.memory_space<smem>>
    %70 = vector.broadcast %69 : f32 to vector<16x16xf32>
    %71 = arith.mulf %70, %6 : vector<16x16xf32>
    %72 = arith.addf %40, %71 : vector<16x16xf32>
    %c2_42 = arith.constant 2 : index
    %c2_43 = arith.constant 2 : index
    %73 = memref.load %arg3[%c2_42, %c2_43] : memref<8x12xf32, #tpu.memory_space<smem>>
    %74 = vector.broadcast %73 : f32 to vector<16x16xf32>
    %75 = arith.mulf %74, %6 : vector<16x16xf32>
    %76 = arith.addf %44, %75 : vector<16x16xf32>
    %c3_44 = arith.constant 3 : index
    %c2_45 = arith.constant 2 : index
    %77 = memref.load %arg3[%c3_44, %c2_45] : memref<8x12xf32, #tpu.memory_space<smem>>
    %78 = vector.broadcast %77 : f32 to vector<16x16xf32>
    %79 = arith.mulf %78, %6 : vector<16x16xf32>
    %80 = arith.addf %48, %79 : vector<16x16xf32>
    %c4_46 = arith.constant 4 : index
    %c2_47 = arith.constant 2 : index
    %81 = memref.load %arg3[%c4_46, %c2_47] : memref<8x12xf32, #tpu.memory_space<smem>>
    %82 = vector.broadcast %81 : f32 to vector<16x16xf32>
    %83 = arith.mulf %82, %6 : vector<16x16xf32>
    %84 = arith.addf %52, %83 : vector<16x16xf32>
    %c5_48 = arith.constant 5 : index
    %c2_49 = arith.constant 2 : index
    %85 = memref.load %arg3[%c5_48, %c2_49] : memref<8x12xf32, #tpu.memory_space<smem>>
    %86 = vector.broadcast %85 : f32 to vector<16x16xf32>
    %87 = arith.mulf %86, %6 : vector<16x16xf32>
    %88 = arith.addf %56, %87 : vector<16x16xf32>
    %c6_50 = arith.constant 6 : index
    %c2_51 = arith.constant 2 : index
    %89 = memref.load %arg3[%c6_50, %c2_51] : memref<8x12xf32, #tpu.memory_space<smem>>
    %90 = vector.broadcast %89 : f32 to vector<16x16xf32>
    %91 = arith.mulf %90, %6 : vector<16x16xf32>
    %92 = arith.addf %60, %91 : vector<16x16xf32>
    %c7_52 = arith.constant 7 : index
    %c2_53 = arith.constant 2 : index
    %93 = memref.load %arg3[%c7_52, %c2_53] : memref<8x12xf32, #tpu.memory_space<smem>>
    %94 = vector.broadcast %93 : f32 to vector<16x16xf32>
    %95 = arith.mulf %94, %6 : vector<16x16xf32>
    %96 = arith.addf %64, %95 : vector<16x16xf32>
    %c0_54 = arith.constant 0 : index
    %c3_55 = arith.constant 3 : index
    %97 = memref.load %arg3[%c0_54, %c3_55] : memref<8x12xf32, #tpu.memory_space<smem>>
    %98 = vector.broadcast %97 : f32 to vector<16x16xf32>
    %99 = arith.mulf %98, %8 : vector<16x16xf32>
    %100 = arith.addf %68, %99 : vector<16x16xf32>
    %c1_56 = arith.constant 1 : index
    %c3_57 = arith.constant 3 : index
    %101 = memref.load %arg3[%c1_56, %c3_57] : memref<8x12xf32, #tpu.memory_space<smem>>
    %102 = vector.broadcast %101 : f32 to vector<16x16xf32>
    %103 = arith.mulf %102, %8 : vector<16x16xf32>
    %104 = arith.addf %72, %103 : vector<16x16xf32>
    %c2_58 = arith.constant 2 : index
    %c3_59 = arith.constant 3 : index
    %105 = memref.load %arg3[%c2_58, %c3_59] : memref<8x12xf32, #tpu.memory_space<smem>>
    %106 = vector.broadcast %105 : f32 to vector<16x16xf32>
    %107 = arith.mulf %106, %8 : vector<16x16xf32>
    %108 = arith.addf %76, %107 : vector<16x16xf32>
    %c3_60 = arith.constant 3 : index
    %c3_61 = arith.constant 3 : index
    %109 = memref.load %arg3[%c3_60, %c3_61] : memref<8x12xf32, #tpu.memory_space<smem>>
    %110 = vector.broadcast %109 : f32 to vector<16x16xf32>
    %111 = arith.mulf %110, %8 : vector<16x16xf32>
    %112 = arith.addf %80, %111 : vector<16x16xf32>
    %c4_62 = arith.constant 4 : index
    %c3_63 = arith.constant 3 : index
    %113 = memref.load %arg3[%c4_62, %c3_63] : memref<8x12xf32, #tpu.memory_space<smem>>
    %114 = vector.broadcast %113 : f32 to vector<16x16xf32>
    %115 = arith.mulf %114, %8 : vector<16x16xf32>
    %116 = arith.addf %84, %115 : vector<16x16xf32>
    %c5_64 = arith.constant 5 : index
    %c3_65 = arith.constant 3 : index
    %117 = memref.load %arg3[%c5_64, %c3_65] : memref<8x12xf32, #tpu.memory_space<smem>>
    %118 = vector.broadcast %117 : f32 to vector<16x16xf32>
    %119 = arith.mulf %118, %8 : vector<16x16xf32>
    %120 = arith.addf %88, %119 : vector<16x16xf32>
    %c6_66 = arith.constant 6 : index
    %c3_67 = arith.constant 3 : index
    %121 = memref.load %arg3[%c6_66, %c3_67] : memref<8x12xf32, #tpu.memory_space<smem>>
    %122 = vector.broadcast %121 : f32 to vector<16x16xf32>
    %123 = arith.mulf %122, %8 : vector<16x16xf32>
    %124 = arith.addf %92, %123 : vector<16x16xf32>
    %c7_68 = arith.constant 7 : index
    %c3_69 = arith.constant 3 : index
    %125 = memref.load %arg3[%c7_68, %c3_69] : memref<8x12xf32, #tpu.memory_space<smem>>
    %126 = vector.broadcast %125 : f32 to vector<16x16xf32>
    %127 = arith.mulf %126, %8 : vector<16x16xf32>
    %128 = arith.addf %96, %127 : vector<16x16xf32>
    %cst = arith.constant dense<0.000000e+00> : vector<16x16xf32>
    %129 = tpu.matmul %0, %2, %cst {dimension_numbers = #tpu.dot_dimension_numbers<[1], [0], [0], [1], [0, 0, 1, 1], [], []>} : vector<16x16xf32>, vector<16x16xf32>, vector<16x16xf32> -> vector<16x16xf32>
    %cst_70 = arith.constant 5.000000e-02 : f32
    %130 = vector.broadcast %cst_70 : f32 to vector<16x16xf32>
    %131 = arith.mulf %130, %2 : vector<16x16xf32>
    %cst_71 = arith.constant 0.949999988 : f32
    %132 = vector.broadcast %cst_71 : f32 to vector<16x16xf32>
    %133 = arith.mulf %132, %129 : vector<16x16xf32>
    %134 = arith.addf %131, %133 : vector<16x16xf32>
    %cst_72 = arith.constant dense<0.000000e+00> : vector<16x16xf32>
    %135 = tpu.matmul %0, %4, %cst_72 {dimension_numbers = #tpu.dot_dimension_numbers<[1], [0], [0], [1], [0, 0, 1, 1], [], []>} : vector<16x16xf32>, vector<16x16xf32>, vector<16x16xf32> -> vector<16x16xf32>
    %cst_73 = arith.constant 5.000000e-02 : f32
    %136 = vector.broadcast %cst_73 : f32 to vector<16x16xf32>
    %137 = arith.mulf %136, %4 : vector<16x16xf32>
    %cst_74 = arith.constant 0.949999988 : f32
    %138 = vector.broadcast %cst_74 : f32 to vector<16x16xf32>
    %139 = arith.mulf %138, %135 : vector<16x16xf32>
    %140 = arith.addf %137, %139 : vector<16x16xf32>
    %cst_75 = arith.constant dense<0.000000e+00> : vector<16x16xf32>
    %141 = tpu.matmul %0, %6, %cst_75 {dimension_numbers = #tpu.dot_dimension_numbers<[1], [0], [0], [1], [0, 0, 1, 1], [], []>} : vector<16x16xf32>, vector<16x16xf32>, vector<16x16xf32> -> vector<16x16xf32>
    %cst_76 = arith.constant 5.000000e-02 : f32
    %142 = vector.broadcast %cst_76 : f32 to vector<16x16xf32>
    %143 = arith.mulf %142, %6 : vector<16x16xf32>
    %cst_77 = arith.constant 0.949999988 : f32
    %144 = vector.broadcast %cst_77 : f32 to vector<16x16xf32>
    %145 = arith.mulf %144, %141 : vector<16x16xf32>
    %146 = arith.addf %143, %145 : vector<16x16xf32>
    %cst_78 = arith.constant dense<0.000000e+00> : vector<16x16xf32>
    %147 = tpu.matmul %0, %8, %cst_78 {dimension_numbers = #tpu.dot_dimension_numbers<[1], [0], [0], [1], [0, 0, 1, 1], [], []>} : vector<16x16xf32>, vector<16x16xf32>, vector<16x16xf32> -> vector<16x16xf32>
    %cst_79 = arith.constant 5.000000e-02 : f32
    %148 = vector.broadcast %cst_79 : f32 to vector<16x16xf32>
    %149 = arith.mulf %148, %8 : vector<16x16xf32>
    %cst_80 = arith.constant 0.949999988 : f32
    %150 = vector.broadcast %cst_80 : f32 to vector<16x16xf32>
    %151 = arith.mulf %150, %147 : vector<16x16xf32>
    %152 = arith.addf %149, %151 : vector<16x16xf32>
    %c0_81 = arith.constant 0 : index
    %c4_82 = arith.constant 4 : index
    %153 = memref.load %arg3[%c0_81, %c4_82] : memref<8x12xf32, #tpu.memory_space<smem>>
    %154 = vector.broadcast %153 : f32 to vector<16x16xf32>
    %155 = arith.mulf %154, %134 : vector<16x16xf32>
    %156 = arith.addf %100, %155 : vector<16x16xf32>
    %c1_83 = arith.constant 1 : index
    %c4_84 = arith.constant 4 : index
    %157 = memref.load %arg3[%c1_83, %c4_84] : memref<8x12xf32, #tpu.memory_space<smem>>
    %158 = vector.broadcast %157 : f32 to vector<16x16xf32>
    %159 = arith.mulf %158, %134 : vector<16x16xf32>
    %160 = arith.addf %104, %159 : vector<16x16xf32>
    %c2_85 = arith.constant 2 : index
    %c4_86 = arith.constant 4 : index
    %161 = memref.load %arg3[%c2_85, %c4_86] : memref<8x12xf32, #tpu.memory_space<smem>>
    %162 = vector.broadcast %161 : f32 to vector<16x16xf32>
    %163 = arith.mulf %162, %134 : vector<16x16xf32>
    %164 = arith.addf %108, %163 : vector<16x16xf32>
    %c3_87 = arith.constant 3 : index
    %c4_88 = arith.constant 4 : index
    %165 = memref.load %arg3[%c3_87, %c4_88] : memref<8x12xf32, #tpu.memory_space<smem>>
    %166 = vector.broadcast %165 : f32 to vector<16x16xf32>
    %167 = arith.mulf %166, %134 : vector<16x16xf32>
    %168 = arith.addf %112, %167 : vector<16x16xf32>
    %c4_89 = arith.constant 4 : index
    %c4_90 = arith.constant 4 : index
    %169 = memref.load %arg3[%c4_89, %c4_90] : memref<8x12xf32, #tpu.memory_space<smem>>
    %170 = vector.broadcast %169 : f32 to vector<16x16xf32>
    %171 = arith.mulf %170, %134 : vector<16x16xf32>
    %172 = arith.addf %116, %171 : vector<16x16xf32>
    %c5_91 = arith.constant 5 : index
    %c4_92 = arith.constant 4 : index
    %173 = memref.load %arg3[%c5_91, %c4_92] : memref<8x12xf32, #tpu.memory_space<smem>>
    %174 = vector.broadcast %173 : f32 to vector<16x16xf32>
    %175 = arith.mulf %174, %134 : vector<16x16xf32>
    %176 = arith.addf %120, %175 : vector<16x16xf32>
    %c6_93 = arith.constant 6 : index
    %c4_94 = arith.constant 4 : index
    %177 = memref.load %arg3[%c6_93, %c4_94] : memref<8x12xf32, #tpu.memory_space<smem>>
    %178 = vector.broadcast %177 : f32 to vector<16x16xf32>
    %179 = arith.mulf %178, %134 : vector<16x16xf32>
    %180 = arith.addf %124, %179 : vector<16x16xf32>
    %c7_95 = arith.constant 7 : index
    %c4_96 = arith.constant 4 : index
    %181 = memref.load %arg3[%c7_95, %c4_96] : memref<8x12xf32, #tpu.memory_space<smem>>
    %182 = vector.broadcast %181 : f32 to vector<16x16xf32>
    %183 = arith.mulf %182, %134 : vector<16x16xf32>
    %184 = arith.addf %128, %183 : vector<16x16xf32>
    %c0_97 = arith.constant 0 : index
    %c5_98 = arith.constant 5 : index
    %185 = memref.load %arg3[%c0_97, %c5_98] : memref<8x12xf32, #tpu.memory_space<smem>>
    %186 = vector.broadcast %185 : f32 to vector<16x16xf32>
    %187 = arith.mulf %186, %140 : vector<16x16xf32>
    %188 = arith.addf %156, %187 : vector<16x16xf32>
    %c1_99 = arith.constant 1 : index
    %c5_100 = arith.constant 5 : index
    %189 = memref.load %arg3[%c1_99, %c5_100] : memref<8x12xf32, #tpu.memory_space<smem>>
    %190 = vector.broadcast %189 : f32 to vector<16x16xf32>
    %191 = arith.mulf %190, %140 : vector<16x16xf32>
    %192 = arith.addf %160, %191 : vector<16x16xf32>
    %c2_101 = arith.constant 2 : index
    %c5_102 = arith.constant 5 : index
    %193 = memref.load %arg3[%c2_101, %c5_102] : memref<8x12xf32, #tpu.memory_space<smem>>
    %194 = vector.broadcast %193 : f32 to vector<16x16xf32>
    %195 = arith.mulf %194, %140 : vector<16x16xf32>
    %196 = arith.addf %164, %195 : vector<16x16xf32>
    %c3_103 = arith.constant 3 : index
    %c5_104 = arith.constant 5 : index
    %197 = memref.load %arg3[%c3_103, %c5_104] : memref<8x12xf32, #tpu.memory_space<smem>>
    %198 = vector.broadcast %197 : f32 to vector<16x16xf32>
    %199 = arith.mulf %198, %140 : vector<16x16xf32>
    %200 = arith.addf %168, %199 : vector<16x16xf32>
    %c4_105 = arith.constant 4 : index
    %c5_106 = arith.constant 5 : index
    %201 = memref.load %arg3[%c4_105, %c5_106] : memref<8x12xf32, #tpu.memory_space<smem>>
    %202 = vector.broadcast %201 : f32 to vector<16x16xf32>
    %203 = arith.mulf %202, %140 : vector<16x16xf32>
    %204 = arith.addf %172, %203 : vector<16x16xf32>
    %c5_107 = arith.constant 5 : index
    %c5_108 = arith.constant 5 : index
    %205 = memref.load %arg3[%c5_107, %c5_108] : memref<8x12xf32, #tpu.memory_space<smem>>
    %206 = vector.broadcast %205 : f32 to vector<16x16xf32>
    %207 = arith.mulf %206, %140 : vector<16x16xf32>
    %208 = arith.addf %176, %207 : vector<16x16xf32>
    %c6_109 = arith.constant 6 : index
    %c5_110 = arith.constant 5 : index
    %209 = memref.load %arg3[%c6_109, %c5_110] : memref<8x12xf32, #tpu.memory_space<smem>>
    %210 = vector.broadcast %209 : f32 to vector<16x16xf32>
    %211 = arith.mulf %210, %140 : vector<16x16xf32>
    %212 = arith.addf %180, %211 : vector<16x16xf32>
    %c7_111 = arith.constant 7 : index
    %c5_112 = arith.constant 5 : index
    %213 = memref.load %arg3[%c7_111, %c5_112] : memref<8x12xf32, #tpu.memory_space<smem>>
    %214 = vector.broadcast %213 : f32 to vector<16x16xf32>
    %215 = arith.mulf %214, %140 : vector<16x16xf32>
    %216 = arith.addf %184, %215 : vector<16x16xf32>
    %c0_113 = arith.constant 0 : index
    %c6_114 = arith.constant 6 : index
    %217 = memref.load %arg3[%c0_113, %c6_114] : memref<8x12xf32, #tpu.memory_space<smem>>
    %218 = vector.broadcast %217 : f32 to vector<16x16xf32>
    %219 = arith.mulf %218, %146 : vector<16x16xf32>
    %220 = arith.addf %188, %219 : vector<16x16xf32>
    %c1_115 = arith.constant 1 : index
    %c6_116 = arith.constant 6 : index
    %221 = memref.load %arg3[%c1_115, %c6_116] : memref<8x12xf32, #tpu.memory_space<smem>>
    %222 = vector.broadcast %221 : f32 to vector<16x16xf32>
    %223 = arith.mulf %222, %146 : vector<16x16xf32>
    %224 = arith.addf %192, %223 : vector<16x16xf32>
    %c2_117 = arith.constant 2 : index
    %c6_118 = arith.constant 6 : index
    %225 = memref.load %arg3[%c2_117, %c6_118] : memref<8x12xf32, #tpu.memory_space<smem>>
    %226 = vector.broadcast %225 : f32 to vector<16x16xf32>
    %227 = arith.mulf %226, %146 : vector<16x16xf32>
    %228 = arith.addf %196, %227 : vector<16x16xf32>
    %c3_119 = arith.constant 3 : index
    %c6_120 = arith.constant 6 : index
    %229 = memref.load %arg3[%c3_119, %c6_120] : memref<8x12xf32, #tpu.memory_space<smem>>
    %230 = vector.broadcast %229 : f32 to vector<16x16xf32>
    %231 = arith.mulf %230, %146 : vector<16x16xf32>
    %232 = arith.addf %200, %231 : vector<16x16xf32>
    %c4_121 = arith.constant 4 : index
    %c6_122 = arith.constant 6 : index
    %233 = memref.load %arg3[%c4_121, %c6_122] : memref<8x12xf32, #tpu.memory_space<smem>>
    %234 = vector.broadcast %233 : f32 to vector<16x16xf32>
    %235 = arith.mulf %234, %146 : vector<16x16xf32>
    %236 = arith.addf %204, %235 : vector<16x16xf32>
    %c5_123 = arith.constant 5 : index
    %c6_124 = arith.constant 6 : index
    %237 = memref.load %arg3[%c5_123, %c6_124] : memref<8x12xf32, #tpu.memory_space<smem>>
    %238 = vector.broadcast %237 : f32 to vector<16x16xf32>
    %239 = arith.mulf %238, %146 : vector<16x16xf32>
    %240 = arith.addf %208, %239 : vector<16x16xf32>
    %c6_125 = arith.constant 6 : index
    %c6_126 = arith.constant 6 : index
    %241 = memref.load %arg3[%c6_125, %c6_126] : memref<8x12xf32, #tpu.memory_space<smem>>
    %242 = vector.broadcast %241 : f32 to vector<16x16xf32>
    %243 = arith.mulf %242, %146 : vector<16x16xf32>
    %244 = arith.addf %212, %243 : vector<16x16xf32>
    %c7_127 = arith.constant 7 : index
    %c6_128 = arith.constant 6 : index
    %245 = memref.load %arg3[%c7_127, %c6_128] : memref<8x12xf32, #tpu.memory_space<smem>>
    %246 = vector.broadcast %245 : f32 to vector<16x16xf32>
    %247 = arith.mulf %246, %146 : vector<16x16xf32>
    %248 = arith.addf %216, %247 : vector<16x16xf32>
    %c0_129 = arith.constant 0 : index
    %c7_130 = arith.constant 7 : index
    %249 = memref.load %arg3[%c0_129, %c7_130] : memref<8x12xf32, #tpu.memory_space<smem>>
    %250 = vector.broadcast %249 : f32 to vector<16x16xf32>
    %251 = arith.mulf %250, %152 : vector<16x16xf32>
    %252 = arith.addf %220, %251 : vector<16x16xf32>
    %c1_131 = arith.constant 1 : index
    %c7_132 = arith.constant 7 : index
    %253 = memref.load %arg3[%c1_131, %c7_132] : memref<8x12xf32, #tpu.memory_space<smem>>
    %254 = vector.broadcast %253 : f32 to vector<16x16xf32>
    %255 = arith.mulf %254, %152 : vector<16x16xf32>
    %256 = arith.addf %224, %255 : vector<16x16xf32>
    %c2_133 = arith.constant 2 : index
    %c7_134 = arith.constant 7 : index
    %257 = memref.load %arg3[%c2_133, %c7_134] : memref<8x12xf32, #tpu.memory_space<smem>>
    %258 = vector.broadcast %257 : f32 to vector<16x16xf32>
    %259 = arith.mulf %258, %152 : vector<16x16xf32>
    %260 = arith.addf %228, %259 : vector<16x16xf32>
    %c3_135 = arith.constant 3 : index
    %c7_136 = arith.constant 7 : index
    %261 = memref.load %arg3[%c3_135, %c7_136] : memref<8x12xf32, #tpu.memory_space<smem>>
    %262 = vector.broadcast %261 : f32 to vector<16x16xf32>
    %263 = arith.mulf %262, %152 : vector<16x16xf32>
    %264 = arith.addf %232, %263 : vector<16x16xf32>
    %c4_137 = arith.constant 4 : index
    %c7_138 = arith.constant 7 : index
    %265 = memref.load %arg3[%c4_137, %c7_138] : memref<8x12xf32, #tpu.memory_space<smem>>
    %266 = vector.broadcast %265 : f32 to vector<16x16xf32>
    %267 = arith.mulf %266, %152 : vector<16x16xf32>
    %268 = arith.addf %236, %267 : vector<16x16xf32>
    %c5_139 = arith.constant 5 : index
    %c7_140 = arith.constant 7 : index
    %269 = memref.load %arg3[%c5_139, %c7_140] : memref<8x12xf32, #tpu.memory_space<smem>>
    %270 = vector.broadcast %269 : f32 to vector<16x16xf32>
    %271 = arith.mulf %270, %152 : vector<16x16xf32>
    %272 = arith.addf %240, %271 : vector<16x16xf32>
    %c6_141 = arith.constant 6 : index
    %c7_142 = arith.constant 7 : index
    %273 = memref.load %arg3[%c6_141, %c7_142] : memref<8x12xf32, #tpu.memory_space<smem>>
    %274 = vector.broadcast %273 : f32 to vector<16x16xf32>
    %275 = arith.mulf %274, %152 : vector<16x16xf32>
    %276 = arith.addf %244, %275 : vector<16x16xf32>
    %c7_143 = arith.constant 7 : index
    %c7_144 = arith.constant 7 : index
    %277 = memref.load %arg3[%c7_143, %c7_144] : memref<8x12xf32, #tpu.memory_space<smem>>
    %278 = vector.broadcast %277 : f32 to vector<16x16xf32>
    %279 = arith.mulf %278, %152 : vector<16x16xf32>
    %280 = arith.addf %248, %279 : vector<16x16xf32>
    %cst_145 = arith.constant dense<0.000000e+00> : vector<16x16xf32>
    %281 = tpu.matmul %0, %134, %cst_145 {dimension_numbers = #tpu.dot_dimension_numbers<[1], [0], [0], [1], [0, 0, 1, 1], [], []>} : vector<16x16xf32>, vector<16x16xf32>, vector<16x16xf32> -> vector<16x16xf32>
    %cst_146 = arith.constant 5.000000e-02 : f32
    %282 = vector.broadcast %cst_146 : f32 to vector<16x16xf32>
    %283 = arith.mulf %282, %2 : vector<16x16xf32>
    %cst_147 = arith.constant 0.949999988 : f32
    %284 = vector.broadcast %cst_147 : f32 to vector<16x16xf32>
    %285 = arith.mulf %284, %281 : vector<16x16xf32>
    %286 = arith.addf %283, %285 : vector<16x16xf32>
    %cst_148 = arith.constant dense<0.000000e+00> : vector<16x16xf32>
    %287 = tpu.matmul %0, %140, %cst_148 {dimension_numbers = #tpu.dot_dimension_numbers<[1], [0], [0], [1], [0, 0, 1, 1], [], []>} : vector<16x16xf32>, vector<16x16xf32>, vector<16x16xf32> -> vector<16x16xf32>
    %cst_149 = arith.constant 5.000000e-02 : f32
    %288 = vector.broadcast %cst_149 : f32 to vector<16x16xf32>
    %289 = arith.mulf %288, %4 : vector<16x16xf32>
    %cst_150 = arith.constant 0.949999988 : f32
    %290 = vector.broadcast %cst_150 : f32 to vector<16x16xf32>
    %291 = arith.mulf %290, %287 : vector<16x16xf32>
    %292 = arith.addf %289, %291 : vector<16x16xf32>
    %cst_151 = arith.constant dense<0.000000e+00> : vector<16x16xf32>
    %293 = tpu.matmul %0, %146, %cst_151 {dimension_numbers = #tpu.dot_dimension_numbers<[1], [0], [0], [1], [0, 0, 1, 1], [], []>} : vector<16x16xf32>, vector<16x16xf32>, vector<16x16xf32> -> vector<16x16xf32>
    %cst_152 = arith.constant 5.000000e-02 : f32
    %294 = vector.broadcast %cst_152 : f32 to vector<16x16xf32>
    %295 = arith.mulf %294, %6 : vector<16x16xf32>
    %cst_153 = arith.constant 0.949999988 : f32
    %296 = vector.broadcast %cst_153 : f32 to vector<16x16xf32>
    %297 = arith.mulf %296, %293 : vector<16x16xf32>
    %298 = arith.addf %295, %297 : vector<16x16xf32>
    %cst_154 = arith.constant dense<0.000000e+00> : vector<16x16xf32>
    %299 = tpu.matmul %0, %152, %cst_154 {dimension_numbers = #tpu.dot_dimension_numbers<[1], [0], [0], [1], [0, 0, 1, 1], [], []>} : vector<16x16xf32>, vector<16x16xf32>, vector<16x16xf32> -> vector<16x16xf32>
    %cst_155 = arith.constant 5.000000e-02 : f32
    %300 = vector.broadcast %cst_155 : f32 to vector<16x16xf32>
    %301 = arith.mulf %300, %8 : vector<16x16xf32>
    %cst_156 = arith.constant 0.949999988 : f32
    %302 = vector.broadcast %cst_156 : f32 to vector<16x16xf32>
    %303 = arith.mulf %302, %299 : vector<16x16xf32>
    %304 = arith.addf %301, %303 : vector<16x16xf32>
    %c0_157 = arith.constant 0 : index
    %c8 = arith.constant 8 : index
    %305 = memref.load %arg3[%c0_157, %c8] : memref<8x12xf32, #tpu.memory_space<smem>>
    %306 = vector.broadcast %305 : f32 to vector<16x16xf32>
    %307 = arith.mulf %306, %286 : vector<16x16xf32>
    %308 = arith.addf %252, %307 : vector<16x16xf32>
    %c1_158 = arith.constant 1 : index
    %c8_159 = arith.constant 8 : index
    %309 = memref.load %arg3[%c1_158, %c8_159] : memref<8x12xf32, #tpu.memory_space<smem>>
    %310 = vector.broadcast %309 : f32 to vector<16x16xf32>
    %311 = arith.mulf %310, %286 : vector<16x16xf32>
    %312 = arith.addf %256, %311 : vector<16x16xf32>
    %c2_160 = arith.constant 2 : index
    %c8_161 = arith.constant 8 : index
    %313 = memref.load %arg3[%c2_160, %c8_161] : memref<8x12xf32, #tpu.memory_space<smem>>
    %314 = vector.broadcast %313 : f32 to vector<16x16xf32>
    %315 = arith.mulf %314, %286 : vector<16x16xf32>
    %316 = arith.addf %260, %315 : vector<16x16xf32>
    %c3_162 = arith.constant 3 : index
    %c8_163 = arith.constant 8 : index
    %317 = memref.load %arg3[%c3_162, %c8_163] : memref<8x12xf32, #tpu.memory_space<smem>>
    %318 = vector.broadcast %317 : f32 to vector<16x16xf32>
    %319 = arith.mulf %318, %286 : vector<16x16xf32>
    %320 = arith.addf %264, %319 : vector<16x16xf32>
    %c4_164 = arith.constant 4 : index
    %c8_165 = arith.constant 8 : index
    %321 = memref.load %arg3[%c4_164, %c8_165] : memref<8x12xf32, #tpu.memory_space<smem>>
    %322 = vector.broadcast %321 : f32 to vector<16x16xf32>
    %323 = arith.mulf %322, %286 : vector<16x16xf32>
    %324 = arith.addf %268, %323 : vector<16x16xf32>
    %c5_166 = arith.constant 5 : index
    %c8_167 = arith.constant 8 : index
    %325 = memref.load %arg3[%c5_166, %c8_167] : memref<8x12xf32, #tpu.memory_space<smem>>
    %326 = vector.broadcast %325 : f32 to vector<16x16xf32>
    %327 = arith.mulf %326, %286 : vector<16x16xf32>
    %328 = arith.addf %272, %327 : vector<16x16xf32>
    %c6_168 = arith.constant 6 : index
    %c8_169 = arith.constant 8 : index
    %329 = memref.load %arg3[%c6_168, %c8_169] : memref<8x12xf32, #tpu.memory_space<smem>>
    %330 = vector.broadcast %329 : f32 to vector<16x16xf32>
    %331 = arith.mulf %330, %286 : vector<16x16xf32>
    %332 = arith.addf %276, %331 : vector<16x16xf32>
    %c7_170 = arith.constant 7 : index
    %c8_171 = arith.constant 8 : index
    %333 = memref.load %arg3[%c7_170, %c8_171] : memref<8x12xf32, #tpu.memory_space<smem>>
    %334 = vector.broadcast %333 : f32 to vector<16x16xf32>
    %335 = arith.mulf %334, %286 : vector<16x16xf32>
    %336 = arith.addf %280, %335 : vector<16x16xf32>
    %c0_172 = arith.constant 0 : index
    %c9 = arith.constant 9 : index
    %337 = memref.load %arg3[%c0_172, %c9] : memref<8x12xf32, #tpu.memory_space<smem>>
    %338 = vector.broadcast %337 : f32 to vector<16x16xf32>
    %339 = arith.mulf %338, %292 : vector<16x16xf32>
    %340 = arith.addf %308, %339 : vector<16x16xf32>
    %c1_173 = arith.constant 1 : index
    %c9_174 = arith.constant 9 : index
    %341 = memref.load %arg3[%c1_173, %c9_174] : memref<8x12xf32, #tpu.memory_space<smem>>
    %342 = vector.broadcast %341 : f32 to vector<16x16xf32>
    %343 = arith.mulf %342, %292 : vector<16x16xf32>
    %344 = arith.addf %312, %343 : vector<16x16xf32>
    %c2_175 = arith.constant 2 : index
    %c9_176 = arith.constant 9 : index
    %345 = memref.load %arg3[%c2_175, %c9_176] : memref<8x12xf32, #tpu.memory_space<smem>>
    %346 = vector.broadcast %345 : f32 to vector<16x16xf32>
    %347 = arith.mulf %346, %292 : vector<16x16xf32>
    %348 = arith.addf %316, %347 : vector<16x16xf32>
    %c3_177 = arith.constant 3 : index
    %c9_178 = arith.constant 9 : index
    %349 = memref.load %arg3[%c3_177, %c9_178] : memref<8x12xf32, #tpu.memory_space<smem>>
    %350 = vector.broadcast %349 : f32 to vector<16x16xf32>
    %351 = arith.mulf %350, %292 : vector<16x16xf32>
    %352 = arith.addf %320, %351 : vector<16x16xf32>
    %c4_179 = arith.constant 4 : index
    %c9_180 = arith.constant 9 : index
    %353 = memref.load %arg3[%c4_179, %c9_180] : memref<8x12xf32, #tpu.memory_space<smem>>
    %354 = vector.broadcast %353 : f32 to vector<16x16xf32>
    %355 = arith.mulf %354, %292 : vector<16x16xf32>
    %356 = arith.addf %324, %355 : vector<16x16xf32>
    %c5_181 = arith.constant 5 : index
    %c9_182 = arith.constant 9 : index
    %357 = memref.load %arg3[%c5_181, %c9_182] : memref<8x12xf32, #tpu.memory_space<smem>>
    %358 = vector.broadcast %357 : f32 to vector<16x16xf32>
    %359 = arith.mulf %358, %292 : vector<16x16xf32>
    %360 = arith.addf %328, %359 : vector<16x16xf32>
    %c6_183 = arith.constant 6 : index
    %c9_184 = arith.constant 9 : index
    %361 = memref.load %arg3[%c6_183, %c9_184] : memref<8x12xf32, #tpu.memory_space<smem>>
    %362 = vector.broadcast %361 : f32 to vector<16x16xf32>
    %363 = arith.mulf %362, %292 : vector<16x16xf32>
    %364 = arith.addf %332, %363 : vector<16x16xf32>
    %c7_185 = arith.constant 7 : index
    %c9_186 = arith.constant 9 : index
    %365 = memref.load %arg3[%c7_185, %c9_186] : memref<8x12xf32, #tpu.memory_space<smem>>
    %366 = vector.broadcast %365 : f32 to vector<16x16xf32>
    %367 = arith.mulf %366, %292 : vector<16x16xf32>
    %368 = arith.addf %336, %367 : vector<16x16xf32>
    %c0_187 = arith.constant 0 : index
    %c10 = arith.constant 10 : index
    %369 = memref.load %arg3[%c0_187, %c10] : memref<8x12xf32, #tpu.memory_space<smem>>
    %370 = vector.broadcast %369 : f32 to vector<16x16xf32>
    %371 = arith.mulf %370, %298 : vector<16x16xf32>
    %372 = arith.addf %340, %371 : vector<16x16xf32>
    %c1_188 = arith.constant 1 : index
    %c10_189 = arith.constant 10 : index
    %373 = memref.load %arg3[%c1_188, %c10_189] : memref<8x12xf32, #tpu.memory_space<smem>>
    %374 = vector.broadcast %373 : f32 to vector<16x16xf32>
    %375 = arith.mulf %374, %298 : vector<16x16xf32>
    %376 = arith.addf %344, %375 : vector<16x16xf32>
    %c2_190 = arith.constant 2 : index
    %c10_191 = arith.constant 10 : index
    %377 = memref.load %arg3[%c2_190, %c10_191] : memref<8x12xf32, #tpu.memory_space<smem>>
    %378 = vector.broadcast %377 : f32 to vector<16x16xf32>
    %379 = arith.mulf %378, %298 : vector<16x16xf32>
    %380 = arith.addf %348, %379 : vector<16x16xf32>
    %c3_192 = arith.constant 3 : index
    %c10_193 = arith.constant 10 : index
    %381 = memref.load %arg3[%c3_192, %c10_193] : memref<8x12xf32, #tpu.memory_space<smem>>
    %382 = vector.broadcast %381 : f32 to vector<16x16xf32>
    %383 = arith.mulf %382, %298 : vector<16x16xf32>
    %384 = arith.addf %352, %383 : vector<16x16xf32>
    %c4_194 = arith.constant 4 : index
    %c10_195 = arith.constant 10 : index
    %385 = memref.load %arg3[%c4_194, %c10_195] : memref<8x12xf32, #tpu.memory_space<smem>>
    %386 = vector.broadcast %385 : f32 to vector<16x16xf32>
    %387 = arith.mulf %386, %298 : vector<16x16xf32>
    %388 = arith.addf %356, %387 : vector<16x16xf32>
    %c5_196 = arith.constant 5 : index
    %c10_197 = arith.constant 10 : index
    %389 = memref.load %arg3[%c5_196, %c10_197] : memref<8x12xf32, #tpu.memory_space<smem>>
    %390 = vector.broadcast %389 : f32 to vector<16x16xf32>
    %391 = arith.mulf %390, %298 : vector<16x16xf32>
    %392 = arith.addf %360, %391 : vector<16x16xf32>
    %c6_198 = arith.constant 6 : index
    %c10_199 = arith.constant 10 : index
    %393 = memref.load %arg3[%c6_198, %c10_199] : memref<8x12xf32, #tpu.memory_space<smem>>
    %394 = vector.broadcast %393 : f32 to vector<16x16xf32>
    %395 = arith.mulf %394, %298 : vector<16x16xf32>
    %396 = arith.addf %364, %395 : vector<16x16xf32>
    %c7_200 = arith.constant 7 : index
    %c10_201 = arith.constant 10 : index
    %397 = memref.load %arg3[%c7_200, %c10_201] : memref<8x12xf32, #tpu.memory_space<smem>>
    %398 = vector.broadcast %397 : f32 to vector<16x16xf32>
    %399 = arith.mulf %398, %298 : vector<16x16xf32>
    %400 = arith.addf %368, %399 : vector<16x16xf32>
    %c0_202 = arith.constant 0 : index
    %c11 = arith.constant 11 : index
    %401 = memref.load %arg3[%c0_202, %c11] : memref<8x12xf32, #tpu.memory_space<smem>>
    %402 = vector.broadcast %401 : f32 to vector<16x16xf32>
    %403 = arith.mulf %402, %304 : vector<16x16xf32>
    %404 = arith.addf %372, %403 : vector<16x16xf32>
    %c1_203 = arith.constant 1 : index
    %c11_204 = arith.constant 11 : index
    %405 = memref.load %arg3[%c1_203, %c11_204] : memref<8x12xf32, #tpu.memory_space<smem>>
    %406 = vector.broadcast %405 : f32 to vector<16x16xf32>
    %407 = arith.mulf %406, %304 : vector<16x16xf32>
    %408 = arith.addf %376, %407 : vector<16x16xf32>
    %c2_205 = arith.constant 2 : index
    %c11_206 = arith.constant 11 : index
    %409 = memref.load %arg3[%c2_205, %c11_206] : memref<8x12xf32, #tpu.memory_space<smem>>
    %410 = vector.broadcast %409 : f32 to vector<16x16xf32>
    %411 = arith.mulf %410, %304 : vector<16x16xf32>
    %412 = arith.addf %380, %411 : vector<16x16xf32>
    %c3_207 = arith.constant 3 : index
    %c11_208 = arith.constant 11 : index
    %413 = memref.load %arg3[%c3_207, %c11_208] : memref<8x12xf32, #tpu.memory_space<smem>>
    %414 = vector.broadcast %413 : f32 to vector<16x16xf32>
    %415 = arith.mulf %414, %304 : vector<16x16xf32>
    %416 = arith.addf %384, %415 : vector<16x16xf32>
    %c4_209 = arith.constant 4 : index
    %c11_210 = arith.constant 11 : index
    %417 = memref.load %arg3[%c4_209, %c11_210] : memref<8x12xf32, #tpu.memory_space<smem>>
    %418 = vector.broadcast %417 : f32 to vector<16x16xf32>
    %419 = arith.mulf %418, %304 : vector<16x16xf32>
    %420 = arith.addf %388, %419 : vector<16x16xf32>
    %c5_211 = arith.constant 5 : index
    %c11_212 = arith.constant 11 : index
    %421 = memref.load %arg3[%c5_211, %c11_212] : memref<8x12xf32, #tpu.memory_space<smem>>
    %422 = vector.broadcast %421 : f32 to vector<16x16xf32>
    %423 = arith.mulf %422, %304 : vector<16x16xf32>
    %424 = arith.addf %392, %423 : vector<16x16xf32>
    %c6_213 = arith.constant 6 : index
    %c11_214 = arith.constant 11 : index
    %425 = memref.load %arg3[%c6_213, %c11_214] : memref<8x12xf32, #tpu.memory_space<smem>>
    %426 = vector.broadcast %425 : f32 to vector<16x16xf32>
    %427 = arith.mulf %426, %304 : vector<16x16xf32>
    %428 = arith.addf %396, %427 : vector<16x16xf32>
    %c7_215 = arith.constant 7 : index
    %c11_216 = arith.constant 11 : index
    %429 = memref.load %arg3[%c7_215, %c11_216] : memref<8x12xf32, #tpu.memory_space<smem>>
    %430 = vector.broadcast %429 : f32 to vector<16x16xf32>
    %431 = arith.mulf %430, %304 : vector<16x16xf32>
    %432 = arith.addf %400, %431 : vector<16x16xf32>
    %c0_217 = arith.constant 0 : index
    %433 = memref.load %arg4[%c0_217] : memref<8xf32, #tpu.memory_space<smem>>
    %434 = vector.broadcast %433 : f32 to vector<16x16xf32>
    %435 = arith.addf %404, %434 : vector<16x16xf32>
    %c0_218 = arith.constant 0 : index
    %c0_219 = arith.constant 0 : index
    %c0_220 = arith.constant 0 : index
    %436 = vector.load %arg5[%c0_218, %c0_219, %c0_220] : memref<8x16x16xf32, #tpu.memory_space<vmem>>, vector<1x16x16xf32>
    %437 = vector.shape_cast %436 : vector<1x16x16xf32> to vector<16x16xf32>
    %438 = vector.shape_cast %435 : vector<16x16xf32> to vector<1x16x16xf32>
    tpu.vector_store %arg5[%c0_218, %c0_219, %c0_220], %438 {strides = array<i32>} : memref<8x16x16xf32, #tpu.memory_space<vmem>>, vector<1x16x16xf32>,
    %c1_221 = arith.constant 1 : index
    %439 = memref.load %arg4[%c1_221] : memref<8xf32, #tpu.memory_space<smem>>
    %440 = vector.broadcast %439 : f32 to vector<16x16xf32>
    %441 = arith.addf %408, %440 : vector<16x16xf32>
    %c1_222 = arith.constant 1 : index
    %c0_223 = arith.constant 0 : index
    %c0_224 = arith.constant 0 : index
    %442 = vector.load %arg5[%c1_222, %c0_223, %c0_224] : memref<8x16x16xf32, #tpu.memory_space<vmem>>, vector<1x16x16xf32>
    %443 = vector.shape_cast %442 : vector<1x16x16xf32> to vector<16x16xf32>
    %444 = vector.shape_cast %441 : vector<16x16xf32> to vector<1x16x16xf32>
    tpu.vector_store %arg5[%c1_222, %c0_223, %c0_224], %444 {strides = array<i32>} : memref<8x16x16xf32, #tpu.memory_space<vmem>>, vector<1x16x16xf32>,
    %c2_225 = arith.constant 2 : index
    %445 = memref.load %arg4[%c2_225] : memref<8xf32, #tpu.memory_space<smem>>
    %446 = vector.broadcast %445 : f32 to vector<16x16xf32>
    %447 = arith.addf %412, %446 : vector<16x16xf32>
    %c2_226 = arith.constant 2 : index
    %c0_227 = arith.constant 0 : index
    %c0_228 = arith.constant 0 : index
    %448 = vector.load %arg5[%c2_226, %c0_227, %c0_228] : memref<8x16x16xf32, #tpu.memory_space<vmem>>, vector<1x16x16xf32>
    %449 = vector.shape_cast %448 : vector<1x16x16xf32> to vector<16x16xf32>
    %450 = vector.shape_cast %447 : vector<16x16xf32> to vector<1x16x16xf32>
    tpu.vector_store %arg5[%c2_226, %c0_227, %c0_228], %450 {strides = array<i32>} : memref<8x16x16xf32, #tpu.memory_space<vmem>>, vector<1x16x16xf32>,
    %c3_229 = arith.constant 3 : index
    %451 = memref.load %arg4[%c3_229] : memref<8xf32, #tpu.memory_space<smem>>
    %452 = vector.broadcast %451 : f32 to vector<16x16xf32>
    %453 = arith.addf %416, %452 : vector<16x16xf32>
    %c3_230 = arith.constant 3 : index
    %c0_231 = arith.constant 0 : index
    %c0_232 = arith.constant 0 : index
    %454 = vector.load %arg5[%c3_230, %c0_231, %c0_232] : memref<8x16x16xf32, #tpu.memory_space<vmem>>, vector<1x16x16xf32>
    %455 = vector.shape_cast %454 : vector<1x16x16xf32> to vector<16x16xf32>
    %456 = vector.shape_cast %453 : vector<16x16xf32> to vector<1x16x16xf32>
    tpu.vector_store %arg5[%c3_230, %c0_231, %c0_232], %456 {strides = array<i32>} : memref<8x16x16xf32, #tpu.memory_space<vmem>>, vector<1x16x16xf32>,
    %c4_233 = arith.constant 4 : index
    %457 = memref.load %arg4[%c4_233] : memref<8xf32, #tpu.memory_space<smem>>
    %458 = vector.broadcast %457 : f32 to vector<16x16xf32>
    %459 = arith.addf %420, %458 : vector<16x16xf32>
    %c4_234 = arith.constant 4 : index
    %c0_235 = arith.constant 0 : index
    %c0_236 = arith.constant 0 : index
    %460 = vector.load %arg5[%c4_234, %c0_235, %c0_236] : memref<8x16x16xf32, #tpu.memory_space<vmem>>, vector<1x16x16xf32>
    %461 = vector.shape_cast %460 : vector<1x16x16xf32> to vector<16x16xf32>
    %462 = vector.shape_cast %459 : vector<16x16xf32> to vector<1x16x16xf32>
    tpu.vector_store %arg5[%c4_234, %c0_235, %c0_236], %462 {strides = array<i32>} : memref<8x16x16xf32, #tpu.memory_space<vmem>>, vector<1x16x16xf32>,
    %c5_237 = arith.constant 5 : index
    %463 = memref.load %arg4[%c5_237] : memref<8xf32, #tpu.memory_space<smem>>
    %464 = vector.broadcast %463 : f32 to vector<16x16xf32>
    %465 = arith.addf %424, %464 : vector<16x16xf32>
    %c5_238 = arith.constant 5 : index
    %c0_239 = arith.constant 0 : index
    %c0_240 = arith.constant 0 : index
    %466 = vector.load %arg5[%c5_238, %c0_239, %c0_240] : memref<8x16x16xf32, #tpu.memory_space<vmem>>, vector<1x16x16xf32>
    %467 = vector.shape_cast %466 : vector<1x16x16xf32> to vector<16x16xf32>
    %468 = vector.shape_cast %465 : vector<16x16xf32> to vector<1x16x16xf32>
    tpu.vector_store %arg5[%c5_238, %c0_239, %c0_240], %468 {strides = array<i32>} : memref<8x16x16xf32, #tpu.memory_space<vmem>>, vector<1x16x16xf32>,
    %c6_241 = arith.constant 6 : index
    %469 = memref.load %arg4[%c6_241] : memref<8xf32, #tpu.memory_space<smem>>
    %470 = vector.broadcast %469 : f32 to vector<16x16xf32>
    %471 = arith.addf %428, %470 : vector<16x16xf32>
    %c6_242 = arith.constant 6 : index
    %c0_243 = arith.constant 0 : index
    %c0_244 = arith.constant 0 : index
    %472 = vector.load %arg5[%c6_242, %c0_243, %c0_244] : memref<8x16x16xf32, #tpu.memory_space<vmem>>, vector<1x16x16xf32>
    %473 = vector.shape_cast %472 : vector<1x16x16xf32> to vector<16x16xf32>
    %474 = vector.shape_cast %471 : vector<16x16xf32> to vector<1x16x16xf32>
    tpu.vector_store %arg5[%c6_242, %c0_243, %c0_244], %474 {strides = array<i32>} : memref<8x16x16xf32, #tpu.memory_space<vmem>>, vector<1x16x16xf32>,
    %c7_245 = arith.constant 7 : index
    %475 = memref.load %arg4[%c7_245] : memref<8xf32, #tpu.memory_space<smem>>
    %476 = vector.broadcast %475 : f32 to vector<16x16xf32>
    %477 = arith.addf %432, %476 : vector<16x16xf32>
    %c7_246 = arith.constant 7 : index
    %c0_247 = arith.constant 0 : index
    %c0_248 = arith.constant 0 : index
    %478 = vector.load %arg5[%c7_246, %c0_247, %c0_248] : memref<8x16x16xf32, #tpu.memory_space<vmem>>, vector<1x16x16xf32>
    %479 = vector.shape_cast %478 : vector<1x16x16xf32> to vector<16x16xf32>
    %480 = vector.shape_cast %477 : vector<16x16xf32> to vector<1x16x16xf32>
    tpu.vector_store %arg5[%c7_246, %c0_247, %c0_248], %480 {strides = array<i32>} : memref<8x16x16xf32, #tpu.memory_space<vmem>>, vector<1x16x16xf32>,
    return
  }
  func.func @transform_0(%arg0: i32) -> (i32, i32) {
    %c0_i32 = arith.constant 0 : i32
    %c0_i32_0 = arith.constant 0 : i32
    %c0_i32_1 = arith.constant 0 : i32
    return %c0_i32, %c0_i32_0 : i32, i32
  }
  func.func @transform_1(%arg0: i32) -> (i32, i32, i32) {
    %c0_i32 = arith.constant 0 : i32
    %c0_i32_0 = arith.constant 0 : i32
    %c0_i32_1 = arith.constant 0 : i32
    return %c0_i32, %c0_i32_0, %arg0 : i32, i32, i32
  }
  func.func @transform_2(%arg0: i32) -> (i32, i32) {
    %c0_i32 = arith.constant 0 : i32
    %c0_i32_0 = arith.constant 0 : i32
    %c0_i32_1 = arith.constant 0 : i32
    return %c0_i32, %c0_i32_0 : i32, i32
  }
  func.func @transform_3(%arg0: i32) -> i32 {
    %c0_i32 = arith.constant 0 : i32
    %c0_i32_0 = arith.constant 0 : i32
    return %c0_i32 : i32
  }
  func.func @transform_4(%arg0: i32) -> (i32, i32, i32) {
    %c0_i32 = arith.constant 0 : i32
    %c0_i32_0 = arith.constant 0 : i32
    %c0_i32_1 = arith.constant 0 : i32
    return %c0_i32, %c0_i32_0, %arg0 : i32, i32, i32
  }
}

</mosaic_0001>

<llo_original>
// kernel: tpu_custom_call.1
$region0: #{tpu_custom_call.1}
  #allocation0 [shape = 'u32[]', space=smem, size = 0x4, offset = 0x4, fixed_abs, tag = 'smem constant byte address 0x4 - core index']
  #allocation1 [shape = 'u32[144,128]{1,0:T(1,128)}', space=vmem, size = 0x12000, scoped, tag = 'internal scratch']
  %s0 = inlined_call_operand.hbm [shape: f32[16,16], index: 0, kind: input, shape index: {}]
  %s1 = inlined_call_operand.hbm [shape: f32[4,16,16], index: 1, kind: input, shape index: {}]
  %s2 = inlined_call_operand.hbm [shape: f32[8,12], index: 2, kind: input, shape index: {}]
  %s3 = inlined_call_operand.vmem [shape: f32[8], index: 3, kind: input, shape index: {}]
  %s4 = inlined_call_operand.hbm [shape: f32[8,16,16], index: 4, kind: output, shape index: {}]
  %s5 = sld [smem:[#allocation0]]
  $region42: #{tpu_custom_call.1} parent=0
    _
  %s7 = ssub.s32 1, %s5
  %s8 = scalar_select 0, %s7, %s5
  $region1: #{tpu_custom_call.1} parent=0
    #allocation2 [shape = 'u8[8192]{0}', space=vmem, size = 0x2000, scoped, tag = 'input window, operand 0, single buffered']
    #allocation3 [shape = 's32[1]{0}', space=sflag, size = 0x4, scoped, tag = 'scoped memory for tpu_custom_call.1']
    #allocation4 [shape = 's32[1]{0}', space=sflag, size = 0x4, scoped, tag = 'scoped memory for tpu_custom_call.1']
    #allocation5 [shape = 's32[1]{0}', space=sflag, size = 0x4, scoped, tag = 'scoped memory for tpu_custom_call.1']
    #allocation6 [shape = 's32[1]{0}', space=sflag, size = 0x4, scoped, tag = 'scoped memory for tpu_custom_call.1']
    #allocation7 [shape = 'u8[32768]{0}', space=vmem, size = 0x8000, scoped, tag = 'input window, operand 1, single buffered']
    #allocation8 [shape = 's32[1]{0}', space=sflag, size = 0x4, scoped, tag = 'scoped memory for tpu_custom_call.1']
    #allocation9 [shape = 'u8[4096]{0}', space=smem, size = 0x1000, scoped, tag = 'input window, operand 2, single buffered']
    #allocation10 [shape = 'u8[512]{0}', space=smem, size = 0x200, scoped, tag = 'input window, operand 3, single buffered']
    #allocation11 [shape = 'u8[65536]{0}', space=vmem, size = 0x10000, scoped, tag = 'output window, operand 0, single buffered']
    %9 = vsyncpa [#allocation3], 0
    %10 = vsyncpa [#allocation8], 0
    %11 = vsyncpa [#allocation5], 0
    %12 = vsyncpa [#allocation6], 0
    %13 = vsyncpa [#allocation4], 0
    // Predicated region
    $region2: #{tpu_custom_call.1} parent=1 // pred_check
      _
    $region3: #{tpu_custom_call.1} parent=1 // pred_check_branch
      %15 = sbr.rel (0) target = $region5
    $region4: #{tpu_custom_call.1} parent=1 // pred_region
      %s17 = ssub.s32 256, 256
      %18 = vsyncadd [#allocation3], %s17
      %s19 = sshll.u32 [#allocation2], 4
      %s20 = int_to_ptr.vmem [resolvable:$true] %s19
      %25 = dma.hbm_to_vmem [thread:$0]  %s0, 256, %s20, [#allocation3], 128, 128, 8
    $region5: #{tpu_custom_call.1} parent=1 // pred_fallthru
      _
    // Predicated region
    $region6: #{tpu_custom_call.1} parent=1 // pred_check
      _
    $region7: #{tpu_custom_call.1} parent=1 // pred_check_branch
      %27 = sbr.rel (0) target = $region9
    $region8: #{tpu_custom_call.1} parent=1 // pred_region
      %s29 = ssub.s32 1024, 1024
      %30 = vsyncadd [#allocation8], %s29
      %s31 = sshll.u32 [#allocation7], 4
      %s32 = int_to_ptr.vmem [resolvable:$true] %s31
      %37 = dma.hbm_to_vmem [thread:$0]  %s1, 1024, %s32, [#allocation8], 128, 128, 8
    $region9: #{tpu_custom_call.1} parent=1 // pred_fallthru
      _
    // Predicated region
    $region10: #{tpu_custom_call.1} parent=1 // pred_check
      _
    $region11: #{tpu_custom_call.1} parent=1 // pred_check_branch
      %39 = sbr.rel (0) target = $region13
    $region12: #{tpu_custom_call.1} parent=1 // pred_region
      %s41 = ssub.s32 128, 128
      %42 = vsyncadd [#allocation5], %s41
      %45 = dma.hbm_to_smem %s2, 128, [#allocation9], [#allocation5]
    $region13: #{tpu_custom_call.1} parent=1 // pred_fallthru
      _
    // Predicated region
    $region14: #{tpu_custom_call.1} parent=1 // pred_check
      _
    $region15: #{tpu_custom_call.1} parent=1 // pred_check_branch
      %47 = sbr.rel (0) target = $region17
    $region16: #{tpu_custom_call.1} parent=1 // pred_region
      %s49 = ssub.s32 16, 16
      %50 = vsyncadd [#allocation6], %s49
      %s52 = sshll.u32 %s3, 4
      %s53 = int_to_ptr.vmem [resolvable:$true] %s52
      %55 = dma.vmem_to_smem %s53, 16, [#allocation10], [#allocation6]
    $region17: #{tpu_custom_call.1} parent=1 // pred_fallthru
      _
    // Predicated region
    $region18: #{tpu_custom_call.1} parent=1 // pred_check
      _
    $region19: #{tpu_custom_call.1} parent=1 // pred_check_branch
      %57 = sbr.rel (0) target = $region21
    $region20: #{tpu_custom_call.1} parent=1 // pred_region
      %58 = dma.done [#allocation3], 256
    $region21: #{tpu_custom_call.1} parent=1 // pred_fallthru
      _
    // Predicated region
    $region22: #{tpu_custom_call.1} parent=1 // pred_check
      _
    $region23: #{tpu_custom_call.1} parent=1 // pred_check_branch
      %60 = sbr.rel (0) target = $region25
    $region24: #{tpu_custom_call.1} parent=1 // pred_region
      %61 = dma.done [#allocation8], 1024
    $region25: #{tpu_custom_call.1} parent=1 // pred_fallthru
      _
    // Predicated region
    $region26: #{tpu_custom_call.1} parent=1 // pred_check
      _
    $region27: #{tpu_custom_call.1} parent=1 // pred_check_branch
      %63 = sbr.rel (0) target = $region29
    $region28: #{tpu_custom_call.1} parent=1 // pred_region
      %64 = dma.done [#allocation5], 128
    $region29: #{tpu_custom_call.1} parent=1 // pred_fallthru
      _
    // Predicated region
    $region30: #{tpu_custom_call.1} parent=1 // pred_check
      _
    $region31: #{tpu_custom_call.1} parent=1 // pred_check_branch
      %66 = sbr.rel (0) target = $region33
    $region32: #{tpu_custom_call.1} parent=1 // pred_region
      %67 = dma.done [#allocation6], 16
    $region33: #{tpu_custom_call.1} parent=1 // pred_fallthru
      _
    %68 = sfence
    %v69 = vld [vmem:[#allocation2] sm:$0xff]
    %v70 = vld [vmem:[#allocation2 + $0x8] sm:$0xff]
    %v71 = vld [vmem:[#allocation7] sm:$0xff]
    %v72 = vld [vmem:[#allocation7 + $0x8] sm:$0xff]
    %s73 = scalar_lea.vmem [#allocation7], 16
    %v74 = vld [vmem:[%s73] sm:$0xff]
    %v75 = vld [vmem:[%s73 + $0x8] sm:$0xff]
    %s76 = scalar_lea.vmem [#allocation7], 32
    %v77 = vld [vmem:[%s76] sm:$0xff]
    %v78 = vld [vmem:[%s76 + $0x8] sm:$0xff]
    %s79 = scalar_lea.vmem [#allocation7], 48
    %v80 = vld [vmem:[%s79] sm:$0xff]
    %v81 = vld [vmem:[%s79 + $0x8] sm:$0xff]
    %s82 = sld [smem:[#allocation9]]
    %v83 = vstv %s82
    %v84 = vmul.f32 %v83, %v71
    %v85 = vmul.f32 %v83, %v72
    %s86 = sld [smem:[#allocation9 + $0x80]]
    %v87 = vstv %s86
    %v88 = vmul.f32 %v87, %v71
    %v89 = vmul.f32 %v87, %v72
    %s90 = sld [smem:[#allocation9 + $0x100]]
    %v91 = vstv %s90
    %v92 = vmul.f32 %v91, %v71
    %v93 = vmul.f32 %v91, %v72
    %s94 = sld [smem:[#allocation9 + $0x180]]
    %v95 = vstv %s94
    %v96 = vmul.f32 %v95, %v71
    %v97 = vmul.f32 %v95, %v72
    %s98 = sld [smem:[#allocation9 + $0x200]]
    %v99 = vstv %s98
    %v100 = vmul.f32 %v99, %v71
    %v101 = vmul.f32 %v99, %v72
    %s102 = sld [smem:[#allocation9 + $0x280]]
    %v103 = vstv %s102
    %v104 = vmul.f32 %v103, %v71
    %v105 = vmul.f32 %v103, %v72
    %s106 = sld [smem:[#allocation9 + $0x300]]
    %v107 = vstv %s106
    %v108 = vmul.f32 %v107, %v71
    %v109 = vmul.f32 %v107, %v72
    %s110 = sld [smem:[#allocation9 + $0x380]]
    %v111 = vstv %s110
    %v112 = vmul.f32 %v111, %v71
    %v113 = vmul.f32 %v111, %v72
    %s114 = sld [smem:[#allocation9 + $0x1]]
    %v115 = vstv %s114
    %v116 = vmul.f32 %v115, %v74
    %v117 = vmul.f32 %v115, %v75
    %v118 = vadd.f32 %v84, %v116
    %v119 = vadd.f32 %v85, %v117
    %s120 = sld [smem:[#allocation9 + $0x81]]
    %v121 = vstv %s120
    %v122 = vmul.f32 %v121, %v74
    %v123 = vmul.f32 %v121, %v75
    %v124 = vadd.f32 %v88, %v122
    %v125 = vadd.f32 %v89, %v123
    %s126 = sld [smem:[#allocation9 + $0x101]]
    %v127 = vstv %s126
    %v128 = vmul.f32 %v127, %v74
    %v129 = vmul.f32 %v127, %v75
    %v130 = vadd.f32 %v92, %v128
    %v131 = vadd.f32 %v93, %v129
    %s132 = sld [smem:[#allocation9 + $0x181]]
    %v133 = vstv %s132
    %v134 = vmul.f32 %v133, %v74
    %v135 = vmul.f32 %v133, %v75
    %v136 = vadd.f32 %v96, %v134
    %v137 = vadd.f32 %v97, %v135
    %s138 = sld [smem:[#allocation9 + $0x201]]
    %v139 = vstv %s138
    %v140 = vmul.f32 %v139, %v74
    %v141 = vmul.f32 %v139, %v75
    %v142 = vadd.f32 %v100, %v140
    %v143 = vadd.f32 %v101, %v141
    %s144 = sld [smem:[#allocation9 + $0x281]]
    %v145 = vstv %s144
    %v146 = vmul.f32 %v145, %v74
    %v147 = vmul.f32 %v145, %v75
    %v148 = vadd.f32 %v104, %v146
    %v149 = vadd.f32 %v105, %v147
    %s150 = sld [smem:[#allocation9 + $0x301]]
    %v151 = vstv %s150
    %v152 = vmul.f32 %v151, %v74
    %v153 = vmul.f32 %v151, %v75
    %v154 = vadd.f32 %v108, %v152
    %v155 = vadd.f32 %v109, %v153
    %s156 = sld [smem:[#allocation9 + $0x381]]
    %v157 = vstv %s156
    %v158 = vmul.f32 %v157, %v74
    %v159 = vmul.f32 %v157, %v75
    %v160 = vadd.f32 %v112, %v158
    %v161 = vadd.f32 %v113, %v159
    %s162 = sld [smem:[#allocation9 + $0x2]]
    %v163 = vstv %s162
    %v164 = vmul.f32 %v163, %v77
    %v165 = vmul.f32 %v163, %v78
    %v166 = vadd.f32 %v118, %v164
    %v167 = vadd.f32 %v119, %v165
    %s168 = sld [smem:[#allocation9 + $0x82]]
    %v169 = vstv %s168
    %v170 = vmul.f32 %v169, %v77
    %v171 = vmul.f32 %v169, %v78
    %v172 = vadd.f32 %v124, %v170
    %v173 = vadd.f32 %v125, %v171
    %s174 = sld [smem:[#allocation9 + $0x102]]
    %v175 = vstv %s174
    %v176 = vmul.f32 %v175, %v77
    %v177 = vmul.f32 %v175, %v78
    %v178 = vadd.f32 %v130, %v176
    %v179 = vadd.f32 %v131, %v177
    %s180 = sld [smem:[#allocation9 + $0x182]]
    %v181 = vstv %s180
    %v182 = vmul.f32 %v181, %v77
    %v183 = vmul.f32 %v181, %v78
    %v184 = vadd.f32 %v136, %v182
    %v185 = vadd.f32 %v137, %v183
    %s186 = sld [smem:[#allocation9 + $0x202]]
    %v187 = vstv %s186
    %v188 = vmul.f32 %v187, %v77
    %v189 = vmul.f32 %v187, %v78
    %v190 = vadd.f32 %v142, %v188
    %v191 = vadd.f32 %v143, %v189
    %s192 = sld [smem:[#allocation9 + $0x282]]
    %v193 = vstv %s192
    %v194 = vmul.f32 %v193, %v77
    %v195 = vmul.f32 %v193, %v78
    %v196 = vadd.f32 %v148, %v194
    %v197 = vadd.f32 %v149, %v195
    %s198 = sld [smem:[#allocation9 + $0x302]]
    %v199 = vstv %s198
    %v200 = vmul.f32 %v199, %v77
    %v201 = vmul.f32 %v199, %v78
    %v202 = vadd.f32 %v154, %v200
    %v203 = vadd.f32 %v155, %v201
    %s204 = sld [smem:[#allocation9 + $0x382]]
    %v205 = vstv %s204
    %v206 = vmul.f32 %v205, %v77
    %v207 = vmul.f32 %v205, %v78
    %v208 = vadd.f32 %v160, %v206
    %v209 = vadd.f32 %v161, %v207
    %s210 = sld [smem:[#allocation9 + $0x3]]
    %v211 = vstv %s210
    %v212 = vmul.f32 %v211, %v80
    %v213 = vmul.f32 %v211, %v81
    %v214 = vadd.f32 %v166, %v212
    %v215 = vadd.f32 %v167, %v213
    %s216 = sld [smem:[#allocation9 + $0x83]]
    %v217 = vstv %s216
    %v218 = vmul.f32 %v217, %v80
    %v219 = vmul.f32 %v217, %v81
    %v220 = vadd.f32 %v172, %v218
    %v221 = vadd.f32 %v173, %v219
    %s222 = sld [smem:[#allocation9 + $0x103]]
    %v223 = vstv %s222
    %v224 = vmul.f32 %v223, %v80
    %v225 = vmul.f32 %v223, %v81
    %v226 = vadd.f32 %v178, %v224
    %v227 = vadd.f32 %v179, %v225
    %s228 = sld [smem:[#allocation9 + $0x183]]
    %v229 = vstv %s228
    %v230 = vmul.f32 %v229, %v80
    %v231 = vmul.f32 %v229, %v81
    %v232 = vadd.f32 %v184, %v230
    %v233 = vadd.f32 %v185, %v231
    %s234 = sld [smem:[#allocation9 + $0x203]]
    %v235 = vstv %s234
    %v236 = vmul.f32 %v235, %v80
    %v237 = vmul.f32 %v235, %v81
    %v238 = vadd.f32 %v190, %v236
    %v239 = vadd.f32 %v191, %v237
    %s240 = sld [smem:[#allocation9 + $0x283]]
    %v241 = vstv %s240
    %v242 = vmul.f32 %v241, %v80
    %v243 = vmul.f32 %v241, %v81
    %v244 = vadd.f32 %v196, %v242
    %v245 = vadd.f32 %v197, %v243
    %s246 = sld [smem:[#allocation9 + $0x303]]
    %v247 = vstv %s246
    %v248 = vmul.f32 %v247, %v80
    %v249 = vmul.f32 %v247, %v81
    %v250 = vadd.f32 %v202, %v248
    %v251 = vadd.f32 %v203, %v249
    %s252 = sld [smem:[#allocation9 + $0x383]]
    %v253 = vstv %s252
    %v254 = vmul.f32 %v253, %v80
    %v255 = vmul.f32 %v253, %v81
    %v256 = vadd.f32 %v208, %v254
    %v257 = vadd.f32 %v209, %v255
    %vm258 = vcmask 130048
    %v260 = vsel %vm258, %v69, 0
    %v263 = vsel %vm258, %v70, 0
    %265 = vmatprep.subr.mxu0 0.0
    %266 = vmatpush1.msra.mxu0 %v71
    %267 = vmatprep.subr.mxu0 0.0
    %268 = vmatpush1.msra.mxu0 %v72
    %269 = vmatprep.subr.mxu0 0.0
    %270 = vmatpush1.msra.mxu0 0.0
    %271 = vmatprep.subr.mxu0 0.0
    %272 = vmatpush1.msra.mxu0 0.0
    %273 = vmatprep.subr.mxu0 0.0
    %274 = vmatpush1.msra.mxu0 0.0
    %275 = vmatprep.subr.mxu0 0.0
    %276 = vmatpush1.msra.mxu0 0.0
    %277 = vmatprep.subr.mxu0 0.0
    %278 = vmatpush1.msra.mxu0 0.0
    %279 = vmatprep.subr.mxu0 0.0
    %280 = vmatpush1.msra.mxu0 0.0
    %281 = vmatprep.subr.mxu0 0.0
    %282 = vmatpush1.msra.mxu0 0.0
    %283 = vmatprep.subr.mxu0 0.0
    %284 = vmatpush1.msra.mxu0 0.0
    %285 = vmatprep.subr.mxu0 0.0
    %286 = vmatpush1.msra.mxu0 0.0
    %287 = vmatprep.subr.mxu0 0.0
    %288 = vmatpush1.msra.mxu0 0.0
    %289 = vmatprep.subr.mxu0 0.0
    %290 = vmatpush1.msra.mxu0 0.0
    %291 = vmatprep.subr.mxu0 0.0
    %292 = vmatpush1.msra.mxu0 0.0
    %293 = vmatprep.subr.mxu0 0.0
    %294 = vmatpush1.msra.mxu0 0.0
    %295 = vmatprep.subr.mxu0 0.0
    %296 = vmatpush1.msra.mxu0 0.0
    %297 = vmatprep.subr.mxu0 0.0
    %298 = vmatpush1.msra.mxu0 0.0
    %299 = vmatprep.subr.mxu0 0.0
    %300 = vmatpush1.msra.mxu0 0.0
    %301 = vmatprep.subr.mxu0 0.0
    %302 = vmatpush1.msra.mxu0 0.0
    %303 = vmatprep.subr.mxu0 0.0
    %304 = vmatpush1.msra.mxu0 0.0
    %305 = vmatprep.subr.mxu0 0.0
    %306 = vmatpush1.msra.mxu0 0.0
    %307 = vmatprep.subr.mxu0 0.0
    %308 = vmatpush1.msra.mxu0 0.0
    %309 = vmatprep.subr.mxu0 0.0
    %310 = vmatpush1.msra.mxu0 0.0
    %311 = vmatprep.subr.mxu0 0.0
    %312 = vmatpush1.msra.mxu0 0.0
    %313 = vmatprep.subr.mxu0 0.0
    %314 = vmatpush1.msra.mxu0 0.0
    %315 = vmatprep.subr.mxu0 0.0
    %316 = vmatpush1.msra.mxu0 0.0
    %317 = vmatprep.subr.mxu0 0.0
    %318 = vmatpush1.msra.mxu0 0.0
    %319 = vmatprep.subr.mxu0 0.0
    %320 = vmatpush1.msra.mxu0 0.0
    %321 = vmatprep.subr.mxu0 0.0
    %322 = vmatpush1.msra.mxu0 0.0
    %323 = vmatprep.subr.mxu0 0.0
    %324 = vmatpush1.msra.mxu0 0.0
    %325 = vmatprep.subr.mxu0 0.0
    %326 = vmatpush1.msra.mxu0 0.0
    %327 = vmatprep.subr.mxu0 0.0
    %328 = vmatpush1.msra.mxu0 0.0
    %329 = vmatprep.mubr.f32.mxu0 0.0
    %330 = vmatmul.mubr.f32.gmra.mrb[0].mxu0 %v260
    %v331 = vpop.f32.mrb[0].mxu0
    %v332 = vadd.f32 0.0, %v331
    %v333 = vpop.f32.mrb[0].mxu0
    %334 = vmatprep.mubr.f32.mxu0 0.0
    %335 = vmatmul.mubr.f32.gmra.mrb[0].mxu0 %v263
    %v336 = vpop.f32.mrb[0].mxu0
    %v337 = vadd.f32 0.0, %v336
    %v338 = vpop.f32.mrb[0].mxu0
    %339 = vdwg.mxu0
    %v340 = vmul.f32 %v71, 0.05
    %v341 = vmul.f32 %v72, 0.05
    %v342 = vmul.f32 %v332, 0.95
    %v343 = vmul.f32 %v337, 0.95
    %v344 = vadd.f32 %v340, %v342
    %v345 = vadd.f32 %v341, %v343
    %346 = vmatprep.subr.mxu0 0.0
    %347 = vmatpush1.msra.mxu0 %v74
    %348 = vmatprep.subr.mxu0 0.0
    %349 = vmatpush1.msra.mxu0 %v75
    %350 = vmatprep.subr.mxu0 0.0
    %351 = vmatpush1.msra.mxu0 0.0
    %352 = vmatprep.subr.mxu0 0.0
    %353 = vmatpush1.msra.mxu0 0.0
    %354 = vmatprep.subr.mxu0 0.0
    %355 = vmatpush1.msra.mxu0 0.0
    %356 = vmatprep.subr.mxu0 0.0
    %357 = vmatpush1.msra.mxu0 0.0
    %358 = vmatprep.subr.mxu0 0.0
    %359 = vmatpush1.msra.mxu0 0.0
    %360 = vmatprep.subr.mxu0 0.0
    %361 = vmatpush1.msra.mxu0 0.0
    %362 = vmatprep.subr.mxu0 0.0
    %363 = vmatpush1.msra.mxu0 0.0
    %364 = vmatprep.subr.mxu0 0.0
    %365 = vmatpush1.msra.mxu0 0.0
    %366 = vmatprep.subr.mxu0 0.0
    %367 = vmatpush1.msra.mxu0 0.0
    %368 = vmatprep.subr.mxu0 0.0
    %369 = vmatpush1.msra.mxu0 0.0
    %370 = vmatprep.subr.mxu0 0.0
    %371 = vmatpush1.msra.mxu0 0.0
    %372 = vmatprep.subr.mxu0 0.0
    %373 = vmatpush1.msra.mxu0 0.0
    %374 = vmatprep.subr.mxu0 0.0
    %375 = vmatpush1.msra.mxu0 0.0
    %376 = vmatprep.subr.mxu0 0.0
    %377 = vmatpush1.msra.mxu0 0.0
    %378 = vmatprep.subr.mxu0 0.0
    %379 = vmatpush1.msra.mxu0 0.0
    %380 = vmatprep.subr.mxu0 0.0
    %381 = vmatpush1.msra.mxu0 0.0
    %382 = vmatprep.subr.mxu0 0.0
    %383 = vmatpush1.msra.mxu0 0.0
    %384 = vmatprep.subr.mxu0 0.0
    %385 = vmatpush1.msra.mxu0 0.0
    %386 = vmatprep.subr.mxu0 0.0
    %387 = vmatpush1.msra.mxu0 0.0
    %388 = vmatprep.subr.mxu0 0.0
    %389 = vmatpush1.msra.mxu0 0.0
    %390 = vmatprep.subr.mxu0 0.0
    %391 = vmatpush1.msra.mxu0 0.0
    %392 = vmatprep.subr.mxu0 0.0
    %393 = vmatpush1.msra.mxu0 0.0
    %394 = vmatprep.subr.mxu0 0.0
    %395 = vmatpush1.msra.mxu0 0.0
    %396 = vmatprep.subr.mxu0 0.0
    %397 = vmatpush1.msra.mxu0 0.0
    %398 = vmatprep.subr.mxu0 0.0
    %399 = vmatpush1.msra.mxu0 0.0
    %400 = vmatprep.subr.mxu0 0.0
    %401 = vmatpush1.msra.mxu0 0.0
    %402 = vmatprep.subr.mxu0 0.0
    %403 = vmatpush1.msra.mxu0 0.0
    %404 = vmatprep.subr.mxu0 0.0
    %405 = vmatpush1.msra.mxu0 0.0
    %406 = vmatprep.subr.mxu0 0.0
    %407 = vmatpush1.msra.mxu0 0.0
    %408 = vmatprep.subr.mxu0 0.0
    %409 = vmatpush1.msra.mxu0 0.0
    %410 = vmatprep.mubr.f32.mxu0 0.0
    %411 = vmatmul.mubr.f32.gmra.mrb[0].mxu0 %v260
    %v412 = vpop.f32.mrb[0].mxu0
    %v413 = vadd.f32 0.0, %v412
    %v414 = vpop.f32.mrb[0].mxu0
    %415 = vmatprep.mubr.f32.mxu0 0.0
    %416 = vmatmul.mubr.f32.gmra.mrb[0].mxu0 %v263
    %v417 = vpop.f32.mrb[0].mxu0
    %v418 = vadd.f32 0.0, %v417
    %v419 = vpop.f32.mrb[0].mxu0
    %420 = vdwg.mxu0
    %v421 = vmul.f32 %v74, 0.05
    %v422 = vmul.f32 %v75, 0.05
    %v423 = vmul.f32 %v413, 0.95
    %v424 = vmul.f32 %v418, 0.95
    %v425 = vadd.f32 %v421, %v423
    %v426 = vadd.f32 %v422, %v424
    %427 = vmatprep.subr.mxu0 0.0
    %428 = vmatpush1.msra.mxu0 %v77
    %429 = vmatprep.subr.mxu0 0.0
    %430 = vmatpush1.msra.mxu0 %v78
    %431 = vmatprep.subr.mxu0 0.0
    %432 = vmatpush1.msra.mxu0 0.0
    %433 = vmatprep.subr.mxu0 0.0
    %434 = vmatpush1.msra.mxu0 0.0
    %435 = vmatprep.subr.mxu0 0.0
    %436 = vmatpush1.msra.mxu0 0.0
    %437 = vmatprep.subr.mxu0 0.0
    %438 = vmatpush1.msra.mxu0 0.0
    %439 = vmatprep.subr.mxu0 0.0
    %440 = vmatpush1.msra.mxu0 0.0
    %441 = vmatprep.subr.mxu0 0.0
    %442 = vmatpush1.msra.mxu0 0.0
    %443 = vmatprep.subr.mxu0 0.0
    %444 = vmatpush1.msra.mxu0 0.0
    %445 = vmatprep.subr.mxu0 0.0
    %446 = vmatpush1.msra.mxu0 0.0
    %447 = vmatprep.subr.mxu0 0.0
    %448 = vmatpush1.msra.mxu0 0.0
    %449 = vmatprep.subr.mxu0 0.0
    %450 = vmatpush1.msra.mxu0 0.0
    %451 = vmatprep.subr.mxu0 0.0
    %452 = vmatpush1.msra.mxu0 0.0
    %453 = vmatprep.subr.mxu0 0.0
    %454 = vmatpush1.msra.mxu0 0.0
    %455 = vmatprep.subr.mxu0 0.0
    %456 = vmatpush1.msra.mxu0 0.0
    %457 = vmatprep.subr.mxu0 0.0
    %458 = vmatpush1.msra.mxu0 0.0
    %459 = vmatprep.subr.mxu0 0.0
    %460 = vmatpush1.msra.mxu0 0.0
    %461 = vmatprep.subr.mxu0 0.0
    %462 = vmatpush1.msra.mxu0 0.0
    %463 = vmatprep.subr.mxu0 0.0
    %464 = vmatpush1.msra.mxu0 0.0
    %465 = vmatprep.subr.mxu0 0.0
    %466 = vmatpush1.msra.mxu0 0.0
    %467 = vmatprep.subr.mxu0 0.0
    %468 = vmatpush1.msra.mxu0 0.0
    %469 = vmatprep.subr.mxu0 0.0
    %470 = vmatpush1.msra.mxu0 0.0
    %471 = vmatprep.subr.mxu0 0.0
    %472 = vmatpush1.msra.mxu0 0.0
    %473 = vmatprep.subr.mxu0 0.0
    %474 = vmatpush1.msra.mxu0 0.0
    %475 = vmatprep.subr.mxu0 0.0
    %476 = vmatpush1.msra.mxu0 0.0
    %477 = vmatprep.subr.mxu0 0.0
    %478 = vmatpush1.msra.mxu0 0.0
    %479 = vmatprep.subr.mxu0 0.0
    %480 = vmatpush1.msra.mxu0 0.0
    %481 = vmatprep.subr.mxu0 0.0
    %482 = vmatpush1.msra.mxu0 0.0
    %483 = vmatprep.subr.mxu0 0.0
    %484 = vmatpush1.msra.mxu0 0.0
    %485 = vmatprep.subr.mxu0 0.0
    %486 = vmatpush1.msra.mxu0 0.0
    %487 = vmatprep.subr.mxu0 0.0
    %488 = vmatpush1.msra.mxu0 0.0
    %489 = vmatprep.subr.mxu0 0.0
    %490 = vmatpush1.msra.mxu0 0.0
    %491 = vmatprep.mubr.f32.mxu0 0.0
    %492 = vmatmul.mubr.f32.gmra.mrb[0].mxu0 %v260
    %v493 = vpop.f32.mrb[0].mxu0
    %v494 = vadd.f32 0.0, %v493
    %v495 = vpop.f32.mrb[0].mxu0
    %496 = vmatprep.mubr.f32.mxu0 0.0
    %497 = vmatmul.mubr.f32.gmra.mrb[0].mxu0 %v263
    %v498 = vpop.f32.mrb[0].mxu0
    %v499 = vadd.f32 0.0, %v498
    %v500 = vpop.f32.mrb[0].mxu0
    %501 = vdwg.mxu0
    %v502 = vmul.f32 %v77, 0.05
    %v503 = vmul.f32 %v78, 0.05
    %v504 = vmul.f32 %v494, 0.95
    %v505 = vmul.f32 %v499, 0.95
    %v506 = vadd.f32 %v502, %v504
    %v507 = vadd.f32 %v503, %v505
    %508 = vmatprep.subr.mxu0 0.0
    %509 = vmatpush1.msra.mxu0 %v80
    %510 = vmatprep.subr.mxu0 0.0
    %511 = vmatpush1.msra.mxu0 %v81
    %512 = vmatprep.subr.mxu0 0.0
    %513 = vmatpush1.msra.mxu0 0.0
    %514 = vmatprep.subr.mxu0 0.0
    %515 = vmatpush1.msra.mxu0 0.0
    %516 = vmatprep.subr.mxu0 0.0
    %517 = vmatpush1.msra.mxu0 0.0
    %518 = vmatprep.subr.mxu0 0.0
    %519 = vmatpush1.msra.mxu0 0.0
    %520 = vmatprep.subr.mxu0 0.0
    %521 = vmatpush1.msra.mxu0 0.0
    %522 = vmatprep.subr.mxu0 0.0
    %523 = vmatpush1.msra.mxu0 0.0
    %524 = vmatprep.subr.mxu0 0.0
    %525 = vmatpush1.msra.mxu0 0.0
    %526 = vmatprep.subr.mxu0 0.0
    %527 = vmatpush1.msra.mxu0 0.0
    %528 = vmatprep.subr.mxu0 0.0
    %529 = vmatpush1.msra.mxu0 0.0
    %530 = vmatprep.subr.mxu0 0.0
    %531 = vmatpush1.msra.mxu0 0.0
    %532 = vmatprep.subr.mxu0 0.0
    %533 = vmatpush1.msra.mxu0 0.0
    %534 = vmatprep.subr.mxu0 0.0
    %535 = vmatpush1.msra.mxu0 0.0
    %536 = vmatprep.subr.mxu0 0.0
    %537 = vmatpush1.msra.mxu0 0.0
    %538 = vmatprep.subr.mxu0 0.0
    %539 = vmatpush1.msra.mxu0 0.0
    %540 = vmatprep.subr.mxu0 0.0
    %541 = vmatpush1.msra.mxu0 0.0
    %542 = vmatprep.subr.mxu0 0.0
    %543 = vmatpush1.msra.mxu0 0.0
    %544 = vmatprep.subr.mxu0 0.0
    %545 = vmatpush1.msra.mxu0 0.0
    %546 = vmatprep.subr.mxu0 0.0
    %547 = vmatpush1.msra.mxu0 0.0
    %548 = vmatprep.subr.mxu0 0.0
    %549 = vmatpush1.msra.mxu0 0.0
    %550 = vmatprep.subr.mxu0 0.0
    %551 = vmatpush1.msra.mxu0 0.0
    %552 = vmatprep.subr.mxu0 0.0
    %553 = vmatpush1.msra.mxu0 0.0
    %554 = vmatprep.subr.mxu0 0.0
    %555 = vmatpush1.msra.mxu0 0.0
    %556 = vmatprep.subr.mxu0 0.0
    %557 = vmatpush1.msra.mxu0 0.0
    %558 = vmatprep.subr.mxu0 0.0
    %559 = vmatpush1.msra.mxu0 0.0
    %560 = vmatprep.subr.mxu0 0.0
    %561 = vmatpush1.msra.mxu0 0.0
    %562 = vmatprep.subr.mxu0 0.0
    %563 = vmatpush1.msra.mxu0 0.0
    %564 = vmatprep.subr.mxu0 0.0
    %565 = vmatpush1.msra.mxu0 0.0
    %566 = vmatprep.subr.mxu0 0.0
    %567 = vmatpush1.msra.mxu0 0.0
    %568 = vmatprep.subr.mxu0 0.0
    %569 = vmatpush1.msra.mxu0 0.0
    %570 = vmatprep.subr.mxu0 0.0
    %571 = vmatpush1.msra.mxu0 0.0
    %572 = vmatprep.mubr.f32.mxu0 0.0
    %573 = vmatmul.mubr.f32.gmra.mrb[0].mxu0 %v260
    %v574 = vpop.f32.mrb[0].mxu0
    %v575 = vadd.f32 0.0, %v574
    %v576 = vpop.f32.mrb[0].mxu0
    %577 = vmatprep.mubr.f32.mxu0 0.0
    %578 = vmatmul.mubr.f32.gmra.mrb[0].mxu0 %v263
    %v579 = vpop.f32.mrb[0].mxu0
    %v580 = vadd.f32 0.0, %v579
    %v581 = vpop.f32.mrb[0].mxu0
    %582 = vdwg.mxu0
    %v583 = vmul.f32 %v80, 0.05
    %v584 = vmul.f32 %v81, 0.05
    %v585 = vmul.f32 %v575, 0.95
    %v586 = vmul.f32 %v580, 0.95
    %v587 = vadd.f32 %v583, %v585
    %v588 = vadd.f32 %v584, %v586
    %s589 = sld [smem:[#allocation9 + $0x4]]
    %v590 = vstv %s589
    %v591 = vmul.f32 %v590, %v344
    %v592 = vmul.f32 %v590, %v345
    %v593 = vadd.f32 %v214, %v591
    %v594 = vadd.f32 %v215, %v592
    %s595 = sld [smem:[#allocation9 + $0x84]]
    %v596 = vstv %s595
    %v597 = vmul.f32 %v596, %v344
    %v598 = vmul.f32 %v596, %v345
    %v599 = vadd.f32 %v220, %v597
    %v600 = vadd.f32 %v221, %v598
    %s601 = sld [smem:[#allocation9 + $0x104]]
    %v602 = vstv %s601
    %v603 = vmul.f32 %v602, %v344
    %v604 = vmul.f32 %v602, %v345
    %v605 = vadd.f32 %v226, %v603
    %v606 = vadd.f32 %v227, %v604
    %s607 = sld [smem:[#allocation9 + $0x184]]
    %v608 = vstv %s607
    %v609 = vmul.f32 %v608, %v344
    %v610 = vmul.f32 %v608, %v345
    %v611 = vadd.f32 %v232, %v609
    %v612 = vadd.f32 %v233, %v610
    %s613 = sld [smem:[#allocation9 + $0x204]]
    %v614 = vstv %s613
    %v615 = vmul.f32 %v614, %v344
    %v616 = vmul.f32 %v614, %v345
    %v617 = vadd.f32 %v238, %v615
    %v618 = vadd.f32 %v239, %v616
    %s619 = sld [smem:[#allocation9 + $0x284]]
    %v620 = vstv %s619
    %v621 = vmul.f32 %v620, %v344
    %v622 = vmul.f32 %v620, %v345
    %v623 = vadd.f32 %v244, %v621
    %v624 = vadd.f32 %v245, %v622
    %s625 = sld [smem:[#allocation9 + $0x304]]
    %v626 = vstv %s625
    %v627 = vmul.f32 %v626, %v344
    %v628 = vmul.f32 %v626, %v345
    %v629 = vadd.f32 %v250, %v627
    %v630 = vadd.f32 %v251, %v628
    %s631 = sld [smem:[#allocation9 + $0x384]]
    %v632 = vstv %s631
    %v633 = vmul.f32 %v632, %v344
    %v634 = vmul.f32 %v632, %v345
    %v635 = vadd.f32 %v256, %v633
    %v636 = vadd.f32 %v257, %v634
    %s637 = sld [smem:[#allocation9 + $0x5]]
    %v638 = vstv %s637
    %v639 = vmul.f32 %v638, %v425
    %v640 = vmul.f32 %v638, %v426
    %v641 = vadd.f32 %v593, %v639
    %v642 = vadd.f32 %v594, %v640
    %s643 = sld [smem:[#allocation9 + $0x85]]
    %v644 = vstv %s643
    %v645 = vmul.f32 %v644, %v425
    %v646 = vmul.f32 %v644, %v426
    %v647 = vadd.f32 %v599, %v645
    %v648 = vadd.f32 %v600, %v646
    %s649 = sld [smem:[#allocation9 + $0x105]]
    %v650 = vstv %s649
    %v651 = vmul.f32 %v650, %v425
    %v652 = vmul.f32 %v650, %v426
    %v653 = vadd.f32 %v605, %v651
    %v654 = vadd.f32 %v606, %v652
    %s655 = sld [smem:[#allocation9 + $0x185]]
    %v656 = vstv %s655
    %v657 = vmul.f32 %v656, %v425
    %v658 = vmul.f32 %v656, %v426
    %v659 = vadd.f32 %v611, %v657
    %v660 = vadd.f32 %v612, %v658
    %s661 = sld [smem:[#allocation9 + $0x205]]
    %v662 = vstv %s661
    %v663 = vmul.f32 %v662, %v425
    %v664 = vmul.f32 %v662, %v426
    %v665 = vadd.f32 %v617, %v663
    %v666 = vadd.f32 %v618, %v664
    %s667 = sld [smem:[#allocation9 + $0x285]]
    %v668 = vstv %s667
    %v669 = vmul.f32 %v668, %v425
    %v670 = vmul.f32 %v668, %v426
    %v671 = vadd.f32 %v623, %v669
    %v672 = vadd.f32 %v624, %v670
    %s673 = sld [smem:[#allocation9 + $0x305]]
    %v674 = vstv %s673
    %v675 = vmul.f32 %v674, %v425
    %v676 = vmul.f32 %v674, %v426
    %v677 = vadd.f32 %v629, %v675
    %v678 = vadd.f32 %v630, %v676
    %s679 = sld [smem:[#allocation9 + $0x385]]
    %v680 = vstv %s679
    %v681 = vmul.f32 %v680, %v425
    %v682 = vmul.f32 %v680, %v426
    %v683 = vadd.f32 %v635, %v681
    %v684 = vadd.f32 %v636, %v682
    %s685 = sld [smem:[#allocation9 + $0x6]]
    %v686 = vstv %s685
    %v687 = vmul.f32 %v686, %v506
    %v688 = vmul.f32 %v686, %v507
    %v689 = vadd.f32 %v641, %v687
    %v690 = vadd.f32 %v642, %v688
    %s691 = sld [smem:[#allocation9 + $0x86]]
    %v692 = vstv %s691
    %v693 = vmul.f32 %v692, %v506
    %v694 = vmul.f32 %v692, %v507
    %v695 = vadd.f32 %v647, %v693
    %v696 = vadd.f32 %v648, %v694
    %s697 = sld [smem:[#allocation9 + $0x106]]
    %v698 = vstv %s697
    %v699 = vmul.f32 %v698, %v506
    %v700 = vmul.f32 %v698, %v507
    %v701 = vadd.f32 %v653, %v699
    %v702 = vadd.f32 %v654, %v700
    %s703 = sld [smem:[#allocation9 + $0x186]]
    %v704 = vstv %s703
    %v705 = vmul.f32 %v704, %v506
    %v706 = vmul.f32 %v704, %v507
    %v707 = vadd.f32 %v659, %v705
    %v708 = vadd.f32 %v660, %v706
    %s709 = sld [smem:[#allocation9 + $0x206]]
    %v710 = vstv %s709
    %v711 = vmul.f32 %v710, %v506
    %v712 = vmul.f32 %v710, %v507
    %v713 = vadd.f32 %v665, %v711
    %v714 = vadd.f32 %v666, %v712
    %s715 = sld [smem:[#allocation9 + $0x286]]
    %v716 = vstv %s715
    %v717 = vmul.f32 %v716, %v506
    %v718 = vmul.f32 %v716, %v507
    %v719 = vadd.f32 %v671, %v717
    %v720 = vadd.f32 %v672, %v718
    %s721 = sld [smem:[#allocation9 + $0x306]]
    %v722 = vstv %s721
    %v723 = vmul.f32 %v722, %v506
    %v724 = vmul.f32 %v722, %v507
    %v725 = vadd.f32 %v677, %v723
    %v726 = vadd.f32 %v678, %v724
    %s727 = sld [smem:[#allocation9 + $0x386]]
    %v728 = vstv %s727
    %v729 = vmul.f32 %v728, %v506
    %v730 = vmul.f32 %v728, %v507
    %v731 = vadd.f32 %v683, %v729
    %v732 = vadd.f32 %v684, %v730
    %s733 = sld [smem:[#allocation9 + $0x7]]
    %v734 = vstv %s733
    %v735 = vmul.f32 %v734, %v587
    %v736 = vmul.f32 %v734, %v588
    %v737 = vadd.f32 %v689, %v735
    %v738 = vadd.f32 %v690, %v736
    %s739 = sld [smem:[#allocation9 + $0x87]]
    %v740 = vstv %s739
    %v741 = vmul.f32 %v740, %v587
    %v742 = vmul.f32 %v740, %v588
    %v743 = vadd.f32 %v695, %v741
    %v744 = vadd.f32 %v696, %v742
    %s745 = sld [smem:[#allocation9 + $0x107]]
    %v746 = vstv %s745
    %v747 = vmul.f32 %v746, %v587
    %v748 = vmul.f32 %v746, %v588
    %v749 = vadd.f32 %v701, %v747
    %v750 = vadd.f32 %v702, %v748
    %s751 = sld [smem:[#allocation9 + $0x187]]
    %v752 = vstv %s751
    %v753 = vmul.f32 %v752, %v587
    %v754 = vmul.f32 %v752, %v588
    %v755 = vadd.f32 %v707, %v753
    %v756 = vadd.f32 %v708, %v754
    %s757 = sld [smem:[#allocation9 + $0x207]]
    %v758 = vstv %s757
    %v759 = vmul.f32 %v758, %v587
    %v760 = vmul.f32 %v758, %v588
    %v761 = vadd.f32 %v713, %v759
    %v762 = vadd.f32 %v714, %v760
    %s763 = sld [smem:[#allocation9 + $0x287]]
    %v764 = vstv %s763
    %v765 = vmul.f32 %v764, %v587
    %v766 = vmul.f32 %v764, %v588
    %v767 = vadd.f32 %v719, %v765
    %v768 = vadd.f32 %v720, %v766
    %s769 = sld [smem:[#allocation9 + $0x307]]
    %v770 = vstv %s769
    %v771 = vmul.f32 %v770, %v587
    %v772 = vmul.f32 %v770, %v588
    %v773 = vadd.f32 %v725, %v771
    %v774 = vadd.f32 %v726, %v772
    %s775 = sld [smem:[#allocation9 + $0x387]]
    %v776 = vstv %s775
    %v777 = vmul.f32 %v776, %v587
    %v778 = vmul.f32 %v776, %v588
    %v779 = vadd.f32 %v731, %v777
    %v780 = vadd.f32 %v732, %v778
    %781 = vmatprep.subr.mxu0 0.0
    %782 = vmatpush1.msra.mxu0 %v344
    %783 = vmatprep.subr.mxu0 0.0
    %784 = vmatpush1.msra.mxu0 %v345
    %785 = vmatprep.subr.mxu0 0.0
    %786 = vmatpush1.msra.mxu0 0.0
    %787 = vmatprep.subr.mxu0 0.0
    %788 = vmatpush1.msra.mxu0 0.0
    %789 = vmatprep.subr.mxu0 0.0
    %790 = vmatpush1.msra.mxu0 0.0
    %791 = vmatprep.subr.mxu0 0.0
    %792 = vmatpush1.msra.mxu0 0.0
    %793 = vmatprep.subr.mxu0 0.0
    %794 = vmatpush1.msra.mxu0 0.0
    %795 = vmatprep.subr.mxu0 0.0
    %796 = vmatpush1.msra.mxu0 0.0
    %797 = vmatprep.subr.mxu0 0.0
    %798 = vmatpush1.msra.mxu0 0.0
    %799 = vmatprep.subr.mxu0 0.0
    %800 = vmatpush1.msra.mxu0 0.0
    %801 = vmatprep.subr.mxu0 0.0
    %802 = vmatpush1.msra.mxu0 0.0
    %803 = vmatprep.subr.mxu0 0.0
    %804 = vmatpush1.msra.mxu0 0.0
    %805 = vmatprep.subr.mxu0 0.0
    %806 = vmatpush1.msra.mxu0 0.0
    %807 = vmatprep.subr.mxu0 0.0
    %808 = vmatpush1.msra.mxu0 0.0
    %809 = vmatprep.subr.mxu0 0.0
    %810 = vmatpush1.msra.mxu0 0.0
    %811 = vmatprep.subr.mxu0 0.0
    %812 = vmatpush1.msra.mxu0 0.0
    %813 = vmatprep.subr.mxu0 0.0
    %814 = vmatpush1.msra.mxu0 0.0
    %815 = vmatprep.subr.mxu0 0.0
    %816 = vmatpush1.msra.mxu0 0.0
    %817 = vmatprep.subr.mxu0 0.0
    %818 = vmatpush1.msra.mxu0 0.0
    %819 = vmatprep.subr.mxu0 0.0
    %820 = vmatpush1.msra.mxu0 0.0
    %821 = vmatprep.subr.mxu0 0.0
    %822 = vmatpush1.msra.mxu0 0.0
    %823 = vmatprep.subr.mxu0 0.0
    %824 = vmatpush1.msra.mxu0 0.0
    %825 = vmatprep.subr.mxu0 0.0
    %826 = vmatpush1.msra.mxu0 0.0
    %827 = vmatprep.subr.mxu0 0.0
    %828 = vmatpush1.msra.mxu0 0.0
    %829 = vmatprep.subr.mxu0 0.0
    %830 = vmatpush1.msra.mxu0 0.0
    %831 = vmatprep.subr.mxu0 0.0
    %832 = vmatpush1.msra.mxu0 0.0
    %833 = vmatprep.subr.mxu0 0.0
    %834 = vmatpush1.msra.mxu0 0.0
    %835 = vmatprep.subr.mxu0 0.0
    %836 = vmatpush1.msra.mxu0 0.0
    %837 = vmatprep.subr.mxu0 0.0
    %838 = vmatpush1.msra.mxu0 0.0
    %839 = vmatprep.subr.mxu0 0.0
    %840 = vmatpush1.msra.mxu0 0.0
    %841 = vmatprep.subr.mxu0 0.0
    %842 = vmatpush1.msra.mxu0 0.0
    %843 = vmatprep.subr.mxu0 0.0
    %844 = vmatpush1.msra.mxu0 0.0
    %845 = vmatprep.mubr.f32.mxu0 0.0
    %846 = vmatmul.mubr.f32.gmra.mrb[0].mxu0 %v260
    %v847 = vpop.f32.mrb[0].mxu0
    %v848 = vadd.f32 0.0, %v847
    %v849 = vpop.f32.mrb[0].mxu0
    %850 = vmatprep.mubr.f32.mxu0 0.0
    %851 = vmatmul.mubr.f32.gmra.mrb[0].mxu0 %v263
    %v852 = vpop.f32.mrb[0].mxu0
    %v853 = vadd.f32 0.0, %v852
    %v854 = vpop.f32.mrb[0].mxu0
    %855 = vdwg.mxu0
    %v856 = vmul.f32 %v848, 0.95
    %v857 = vmul.f32 %v853, 0.95
    %v858 = vadd.f32 %v340, %v856
    %v859 = vadd.f32 %v341, %v857
    %860 = vmatprep.subr.mxu0 0.0
    %861 = vmatpush1.msra.mxu0 %v425
    %862 = vmatprep.subr.mxu0 0.0
    %863 = vmatpush1.msra.mxu0 %v426
    %864 = vmatprep.subr.mxu0 0.0
    %865 = vmatpush1.msra.mxu0 0.0
    %866 = vmatprep.subr.mxu0 0.0
    %867 = vmatpush1.msra.mxu0 0.0
    %868 = vmatprep.subr.mxu0 0.0
    %869 = vmatpush1.msra.mxu0 0.0
    %870 = vmatprep.subr.mxu0 0.0
    %871 = vmatpush1.msra.mxu0 0.0
    %872 = vmatprep.subr.mxu0 0.0
    %873 = vmatpush1.msra.mxu0 0.0
    %874 = vmatprep.subr.mxu0 0.0
    %875 = vmatpush1.msra.mxu0 0.0
    %876 = vmatprep.subr.mxu0 0.0
    %877 = vmatpush1.msra.mxu0 0.0
    %878 = vmatprep.subr.mxu0 0.0
    %879 = vmatpush1.msra.mxu0 0.0
    %880 = vmatprep.subr.mxu0 0.0
    %881 = vmatpush1.msra.mxu0 0.0
    %882 = vmatprep.subr.mxu0 0.0
    %883 = vmatpush1.msra.mxu0 0.0
    %884 = vmatprep.subr.mxu0 0.0
    %885 = vmatpush1.msra.mxu0 0.0
    %886 = vmatprep.subr.mxu0 0.0
    %887 = vmatpush1.msra.mxu0 0.0
    %888 = vmatprep.subr.mxu0 0.0
    %889 = vmatpush1.msra.mxu0 0.0
    %890 = vmatprep.subr.mxu0 0.0
    %891 = vmatpush1.msra.mxu0 0.0
    %892 = vmatprep.subr.mxu0 0.0
    %893 = vmatpush1.msra.mxu0 0.0
    %894 = vmatprep.subr.mxu0 0.0
    %895 = vmatpush1.msra.mxu0 0.0
    %896 = vmatprep.subr.mxu0 0.0
    %897 = vmatpush1.msra.mxu0 0.0
    %898 = vmatprep.subr.mxu0 0.0
    %899 = vmatpush1.msra.mxu0 0.0
    %900 = vmatprep.subr.mxu0 0.0
    %901 = vmatpush1.msra.mxu0 0.0
    %902 = vmatprep.subr.mxu0 0.0
    %903 = vmatpush1.msra.mxu0 0.0
    %904 = vmatprep.subr.mxu0 0.0
    %905 = vmatpush1.msra.mxu0 0.0
    %906 = vmatprep.subr.mxu0 0.0
    %907 = vmatpush1.msra.mxu0 0.0
    %908 = vmatprep.subr.mxu0 0.0
    %909 = vmatpush1.msra.mxu0 0.0
    %910 = vmatprep.subr.mxu0 0.0
    %911 = vmatpush1.msra.mxu0 0.0
    %912 = vmatprep.subr.mxu0 0.0
    %913 = vmatpush1.msra.mxu0 0.0
    %914 = vmatprep.subr.mxu0 0.0
    %915 = vmatpush1.msra.mxu0 0.0
    %916 = vmatprep.subr.mxu0 0.0
    %917 = vmatpush1.msra.mxu0 0.0
    %918 = vmatprep.subr.mxu0 0.0
    %919 = vmatpush1.msra.mxu0 0.0
    %920 = vmatprep.subr.mxu0 0.0
    %921 = vmatpush1.msra.mxu0 0.0
    %922 = vmatprep.subr.mxu0 0.0
    %923 = vmatpush1.msra.mxu0 0.0
    %924 = vmatprep.mubr.f32.mxu0 0.0
    %925 = vmatmul.mubr.f32.gmra.mrb[0].mxu0 %v260
    %v926 = vpop.f32.mrb[0].mxu0
    %v927 = vadd.f32 0.0, %v926
    %v928 = vpop.f32.mrb[0].mxu0
    %929 = vmatprep.mubr.f32.mxu0 0.0
    %930 = vmatmul.mubr.f32.gmra.mrb[0].mxu0 %v263
    %v931 = vpop.f32.mrb[0].mxu0
    %v932 = vadd.f32 0.0, %v931
    %v933 = vpop.f32.mrb[0].mxu0
    %934 = vdwg.mxu0
    %v935 = vmul.f32 %v927, 0.95
    %v936 = vmul.f32 %v932, 0.95
    %v937 = vadd.f32 %v421, %v935
    %v938 = vadd.f32 %v422, %v936
    %939 = vmatprep.subr.mxu0 0.0
    %940 = vmatpush1.msra.mxu0 %v506
    %941 = vmatprep.subr.mxu0 0.0
    %942 = vmatpush1.msra.mxu0 %v507
    %943 = vmatprep.subr.mxu0 0.0
    %944 = vmatpush1.msra.mxu0 0.0
    %945 = vmatprep.subr.mxu0 0.0
    %946 = vmatpush1.msra.mxu0 0.0
    %947 = vmatprep.subr.mxu0 0.0
    %948 = vmatpush1.msra.mxu0 0.0
    %949 = vmatprep.subr.mxu0 0.0
    %950 = vmatpush1.msra.mxu0 0.0
    %951 = vmatprep.subr.mxu0 0.0
    %952 = vmatpush1.msra.mxu0 0.0
    %953 = vmatprep.subr.mxu0 0.0
    %954 = vmatpush1.msra.mxu0 0.0
    %955 = vmatprep.subr.mxu0 0.0
    %956 = vmatpush1.msra.mxu0 0.0
    %957 = vmatprep.subr.mxu0 0.0
    %958 = vmatpush1.msra.mxu0 0.0
    %959 = vmatprep.subr.mxu0 0.0
    %960 = vmatpush1.msra.mxu0 0.0
    %961 = vmatprep.subr.mxu0 0.0
    %962 = vmatpush1.msra.mxu0 0.0
    %963 = vmatprep.subr.mxu0 0.0
    %964 = vmatpush1.msra.mxu0 0.0
    %965 = vmatprep.subr.mxu0 0.0
    %966 = vmatpush1.msra.mxu0 0.0
    %967 = vmatprep.subr.mxu0 0.0
    %968 = vmatpush1.msra.mxu0 0.0
    %969 = vmatprep.subr.mxu0 0.0
    %970 = vmatpush1.msra.mxu0 0.0
    %971 = vmatprep.subr.mxu0 0.0
    %972 = vmatpush1.msra.mxu0 0.0
    %973 = vmatprep.subr.mxu0 0.0
    %974 = vmatpush1.msra.mxu0 0.0
    %975 = vmatprep.subr.mxu0 0.0
    %976 = vmatpush1.msra.mxu0 0.0
    %977 = vmatprep.subr.mxu0 0.0
    %978 = vmatpush1.msra.mxu0 0.0
    %979 = vmatprep.subr.mxu0 0.0
    %980 = vmatpush1.msra.mxu0 0.0
    %981 = vmatprep.subr.mxu0 0.0
    %982 = vmatpush1.msra.mxu0 0.0
    %983 = vmatprep.subr.mxu0 0.0
    %984 = vmatpush1.msra.mxu0 0.0
    %985 = vmatprep.subr.mxu0 0.0
    %986 = vmatpush1.msra.mxu0 0.0
    %987 = vmatprep.subr.mxu0 0.0
    %988 = vmatpush1.msra.mxu0 0.0
    %989 = vmatprep.subr.mxu0 0.0
    %990 = vmatpush1.msra.mxu0 0.0
    %991 = vmatprep.subr.mxu0 0.0
    %992 = vmatpush1.msra.mxu0 0.0
    %993 = vmatprep.subr.mxu0 0.0
    %994 = vmatpush1.msra.mxu0 0.0
    %995 = vmatprep.subr.mxu0 0.0
    %996 = vmatpush1.msra.mxu0 0.0
    %997 = vmatprep.subr.mxu0 0.0
    %998 = vmatpush1.msra.mxu0 0.0
    %999 = vmatprep.subr.mxu0 0.0
    %1000 = vmatpush1.msra.mxu0 0.0
    %1001 = vmatprep.subr.mxu0 0.0
    %1002 = vmatpush1.msra.mxu0 0.0
    %1003 = vmatprep.mubr.f32.mxu0 0.0
    %1004 = vmatmul.mubr.f32.gmra.mrb[0].mxu0 %v260
    %v1005 = vpop.f32.mrb[0].mxu0
    %v1006 = vadd.f32 0.0, %v1005
    %v1007 = vpop.f32.mrb[0].mxu0
    %1008 = vmatprep.mubr.f32.mxu0 0.0
    %1009 = vmatmul.mubr.f32.gmra.mrb[0].mxu0 %v263
    %v1010 = vpop.f32.mrb[0].mxu0
    %v1011 = vadd.f32 0.0, %v1010
    %v1012 = vpop.f32.mrb[0].mxu0
    %1013 = vdwg.mxu0
    %v1014 = vmul.f32 %v1006, 0.95
    %v1015 = vmul.f32 %v1011, 0.95
    %v1016 = vadd.f32 %v502, %v1014
    %v1017 = vadd.f32 %v503, %v1015
    %1018 = vmatprep.subr.mxu0 0.0
    %1019 = vmatpush1.msra.mxu0 %v587
    %1020 = vmatprep.subr.mxu0 0.0
    %1021 = vmatpush1.msra.mxu0 %v588
    %1022 = vmatprep.subr.mxu0 0.0
    %1023 = vmatpush1.msra.mxu0 0.0
    %1024 = vmatprep.subr.mxu0 0.0
    %1025 = vmatpush1.msra.mxu0 0.0
    %1026 = vmatprep.subr.mxu0 0.0
    %1027 = vmatpush1.msra.mxu0 0.0
    %1028 = vmatprep.subr.mxu0 0.0
    %1029 = vmatpush1.msra.mxu0 0.0
    %1030 = vmatprep.subr.mxu0 0.0
    %1031 = vmatpush1.msra.mxu0 0.0
    %1032 = vmatprep.subr.mxu0 0.0
    %1033 = vmatpush1.msra.mxu0 0.0
    %1034 = vmatprep.subr.mxu0 0.0
    %1035 = vmatpush1.msra.mxu0 0.0
    %1036 = vmatprep.subr.mxu0 0.0
    %1037 = vmatpush1.msra.mxu0 0.0
    %1038 = vmatprep.subr.mxu0 0.0
    %1039 = vmatpush1.msra.mxu0 0.0
    %1040 = vmatprep.subr.mxu0 0.0
    %1041 = vmatpush1.msra.mxu0 0.0
    %1042 = vmatprep.subr.mxu0 0.0
    %1043 = vmatpush1.msra.mxu0 0.0
    %1044 = vmatprep.subr.mxu0 0.0
    %1045 = vmatpush1.msra.mxu0 0.0
    %1046 = vmatprep.subr.mxu0 0.0
    %1047 = vmatpush1.msra.mxu0 0.0
    %1048 = vmatprep.subr.mxu0 0.0
    %1049 = vmatpush1.msra.mxu0 0.0
    %1050 = vmatprep.subr.mxu0 0.0
    %1051 = vmatpush1.msra.mxu0 0.0
    %1052 = vmatprep.subr.mxu0 0.0
    %1053 = vmatpush1.msra.mxu0 0.0
    %1054 = vmatprep.subr.mxu0 0.0
    %1055 = vmatpush1.msra.mxu0 0.0
    %1056 = vmatprep.subr.mxu0 0.0
    %1057 = vmatpush1.msra.mxu0 0.0
    %1058 = vmatprep.subr.mxu0 0.0
    %1059 = vmatpush1.msra.mxu0 0.0
    %1060 = vmatprep.subr.mxu0 0.0
    %1061 = vmatpush1.msra.mxu0 0.0
    %1062 = vmatprep.subr.mxu0 0.0
    %1063 = vmatpush1.msra.mxu0 0.0
    %1064 = vmatprep.subr.mxu0 0.0
    %1065 = vmatpush1.msra.mxu0 0.0
    %1066 = vmatprep.subr.mxu0 0.0
    %1067 = vmatpush1.msra.mxu0 0.0
    %1068 = vmatprep.subr.mxu0 0.0
    %1069 = vmatpush1.msra.mxu0 0.0
    %1070 = vmatprep.subr.mxu0 0.0
    %1071 = vmatpush1.msra.mxu0 0.0
    %1072 = vmatprep.subr.mxu0 0.0
    %1073 = vmatpush1.msra.mxu0 0.0
    %1074 = vmatprep.subr.mxu0 0.0
    %1075 = vmatpush1.msra.mxu0 0.0
    %1076 = vmatprep.subr.mxu0 0.0
    %1077 = vmatpush1.msra.mxu0 0.0
    %1078 = vmatprep.subr.mxu0 0.0
    %1079 = vmatpush1.msra.mxu0 0.0
    %1080 = vmatprep.subr.mxu0 0.0
    %1081 = vmatpush1.msra.mxu0 0.0
    %1082 = vmatprep.mubr.f32.mxu0 0.0
    %1083 = vmatmul.mubr.f32.gmra.mrb[0].mxu0 %v260
    %v1084 = vpop.f32.mrb[0].mxu0
    %v1085 = vadd.f32 0.0, %v1084
    %v1086 = vpop.f32.mrb[0].mxu0
    %1087 = vmatprep.mubr.f32.mxu0 0.0
    %1088 = vmatmul.mubr.f32.gmra.mrb[0].mxu0 %v263
    %v1089 = vpop.f32.mrb[0].mxu0
    %v1090 = vadd.f32 0.0, %v1089
    %v1091 = vpop.f32.mrb[0].mxu0
    %1092 = vdwg.mxu0
    %v1093 = vmul.f32 %v1085, 0.95
    %v1094 = vmul.f32 %v1090, 0.95
    %v1095 = vadd.f32 %v583, %v1093
    %v1096 = vadd.f32 %v584, %v1094
    %s1097 = sld [smem:[#allocation9 + $0x8]]
    %v1098 = vstv %s1097
    %v1099 = vmul.f32 %v1098, %v858
    %v1100 = vmul.f32 %v1098, %v859
    %v1101 = vadd.f32 %v737, %v1099
    %v1102 = vadd.f32 %v738, %v1100
    %s1103 = sld [smem:[#allocation9 + $0x88]]
    %v1104 = vstv %s1103
    %v1105 = vmul.f32 %v1104, %v858
    %v1106 = vmul.f32 %v1104, %v859
    %v1107 = vadd.f32 %v743, %v1105
    %v1108 = vadd.f32 %v744, %v1106
    %s1109 = sld [smem:[#allocation9 + $0x108]]
    %v1110 = vstv %s1109
    %v1111 = vmul.f32 %v1110, %v858
    %v1112 = vmul.f32 %v1110, %v859
    %v1113 = vadd.f32 %v749, %v1111
    %v1114 = vadd.f32 %v750, %v1112
    %s1115 = sld [smem:[#allocation9 + $0x188]]
    %v1116 = vstv %s1115
    %v1117 = vmul.f32 %v1116, %v858
    %v1118 = vmul.f32 %v1116, %v859
    %v1119 = vadd.f32 %v755, %v1117
    %v1120 = vadd.f32 %v756, %v1118
    %s1121 = sld [smem:[#allocation9 + $0x208]]
    %v1122 = vstv %s1121
    %v1123 = vmul.f32 %v1122, %v858
    %v1124 = vmul.f32 %v1122, %v859
    %v1125 = vadd.f32 %v761, %v1123
    %v1126 = vadd.f32 %v762, %v1124
    %s1127 = sld [smem:[#allocation9 + $0x288]]
    %v1128 = vstv %s1127
    %v1129 = vmul.f32 %v1128, %v858
    %v1130 = vmul.f32 %v1128, %v859
    %v1131 = vadd.f32 %v767, %v1129
    %v1132 = vadd.f32 %v768, %v1130
    %s1133 = sld [smem:[#allocation9 + $0x308]]
    %v1134 = vstv %s1133
    %v1135 = vmul.f32 %v1134, %v858
    %v1136 = vmul.f32 %v1134, %v859
    %v1137 = vadd.f32 %v773, %v1135
    %v1138 = vadd.f32 %v774, %v1136
    %s1139 = sld [smem:[#allocation9 + $0x388]]
    %v1140 = vstv %s1139
    %v1141 = vmul.f32 %v1140, %v858
    %v1142 = vmul.f32 %v1140, %v859
    %v1143 = vadd.f32 %v779, %v1141
    %v1144 = vadd.f32 %v780, %v1142
    %s1145 = sld [smem:[#allocation9 + $0x9]]
    %v1146 = vstv %s1145
    %v1147 = vmul.f32 %v1146, %v937
    %v1148 = vmul.f32 %v1146, %v938
    %v1149 = vadd.f32 %v1101, %v1147
    %v1150 = vadd.f32 %v1102, %v1148
    %s1151 = sld [smem:[#allocation9 + $0x89]]
    %v1152 = vstv %s1151
    %v1153 = vmul.f32 %v1152, %v937
    %v1154 = vmul.f32 %v1152, %v938
    %v1155 = vadd.f32 %v1107, %v1153
    %v1156 = vadd.f32 %v1108, %v1154
    %s1157 = sld [smem:[#allocation9 + $0x109]]
    %v1158 = vstv %s1157
    %v1159 = vmul.f32 %v1158, %v937
    %v1160 = vmul.f32 %v1158, %v938
    %v1161 = vadd.f32 %v1113, %v1159
    %v1162 = vadd.f32 %v1114, %v1160
    %s1163 = sld [smem:[#allocation9 + $0x189]]
    %v1164 = vstv %s1163
    %v1165 = vmul.f32 %v1164, %v937
    %v1166 = vmul.f32 %v1164, %v938
    %v1167 = vadd.f32 %v1119, %v1165
    %v1168 = vadd.f32 %v1120, %v1166
    %s1169 = sld [smem:[#allocation9 + $0x209]]
    %v1170 = vstv %s1169
    %v1171 = vmul.f32 %v1170, %v937
    %v1172 = vmul.f32 %v1170, %v938
    %v1173 = vadd.f32 %v1125, %v1171
    %v1174 = vadd.f32 %v1126, %v1172
    %s1175 = sld [smem:[#allocation9 + $0x289]]
    %v1176 = vstv %s1175
    %v1177 = vmul.f32 %v1176, %v937
    %v1178 = vmul.f32 %v1176, %v938
    %v1179 = vadd.f32 %v1131, %v1177
    %v1180 = vadd.f32 %v1132, %v1178
    %s1181 = sld [smem:[#allocation9 + $0x309]]
    %v1182 = vstv %s1181
    %v1183 = vmul.f32 %v1182, %v937
    %v1184 = vmul.f32 %v1182, %v938
    %v1185 = vadd.f32 %v1137, %v1183
    %v1186 = vadd.f32 %v1138, %v1184
    %s1187 = sld [smem:[#allocation9 + $0x389]]
    %v1188 = vstv %s1187
    %v1189 = vmul.f32 %v1188, %v937
    %v1190 = vmul.f32 %v1188, %v938
    %v1191 = vadd.f32 %v1143, %v1189
    %v1192 = vadd.f32 %v1144, %v1190
    %s1193 = sld [smem:[#allocation9 + $0xa]]
    %v1194 = vstv %s1193
    %v1195 = vmul.f32 %v1194, %v1016
    %v1196 = vmul.f32 %v1194, %v1017
    %v1197 = vadd.f32 %v1149, %v1195
    %v1198 = vadd.f32 %v1150, %v1196
    %s1199 = sld [smem:[#allocation9 + $0x8a]]
    %v1200 = vstv %s1199
    %v1201 = vmul.f32 %v1200, %v1016
    %v1202 = vmul.f32 %v1200, %v1017
    %v1203 = vadd.f32 %v1155, %v1201
    %v1204 = vadd.f32 %v1156, %v1202
    %s1205 = sld [smem:[#allocation9 + $0x10a]]
    %v1206 = vstv %s1205
    %v1207 = vmul.f32 %v1206, %v1016
    %v1208 = vmul.f32 %v1206, %v1017
    %v1209 = vadd.f32 %v1161, %v1207
    %v1210 = vadd.f32 %v1162, %v1208
    %s1211 = sld [smem:[#allocation9 + $0x18a]]
    %v1212 = vstv %s1211
    %v1213 = vmul.f32 %v1212, %v1016
    %v1214 = vmul.f32 %v1212, %v1017
    %v1215 = vadd.f32 %v1167, %v1213
    %v1216 = vadd.f32 %v1168, %v1214
    %s1217 = sld [smem:[#allocation9 + $0x20a]]
    %v1218 = vstv %s1217
    %v1219 = vmul.f32 %v1218, %v1016
    %v1220 = vmul.f32 %v1218, %v1017
    %v1221 = vadd.f32 %v1173, %v1219
    %v1222 = vadd.f32 %v1174, %v1220
    %s1223 = sld [smem:[#allocation9 + $0x28a]]
    %v1224 = vstv %s1223
    %v1225 = vmul.f32 %v1224, %v1016
    %v1226 = vmul.f32 %v1224, %v1017
    %v1227 = vadd.f32 %v1179, %v1225
    %v1228 = vadd.f32 %v1180, %v1226
    %s1229 = sld [smem:[#allocation9 + $0x30a]]
    %v1230 = vstv %s1229
    %v1231 = vmul.f32 %v1230, %v1016
    %v1232 = vmul.f32 %v1230, %v1017
    %v1233 = vadd.f32 %v1185, %v1231
    %v1234 = vadd.f32 %v1186, %v1232
    %s1235 = sld [smem:[#allocation9 + $0x38a]]
    %v1236 = vstv %s1235
    %v1237 = vmul.f32 %v1236, %v1016
    %v1238 = vmul.f32 %v1236, %v1017
    %v1239 = vadd.f32 %v1191, %v1237
    %v1240 = vadd.f32 %v1192, %v1238
    %s1241 = sld [smem:[#allocation9 + $0xb]]
    %v1242 = vstv %s1241
    %v1243 = vmul.f32 %v1242, %v1095
    %v1244 = vmul.f32 %v1242, %v1096
    %v1245 = vadd.f32 %v1197, %v1243
    %v1246 = vadd.f32 %v1198, %v1244
    %s1247 = sld [smem:[#allocation9 + $0x8b]]
    %v1248 = vstv %s1247
    %v1249 = vmul.f32 %v1248, %v1095
    %v1250 = vmul.f32 %v1248, %v1096
    %v1251 = vadd.f32 %v1203, %v1249
    %v1252 = vadd.f32 %v1204, %v1250
    %s1253 = sld [smem:[#allocation9 + $0x10b]]
    %v1254 = vstv %s1253
    %v1255 = vmul.f32 %v1254, %v1095
    %v1256 = vmul.f32 %v1254, %v1096
    %v1257 = vadd.f32 %v1209, %v1255
    %v1258 = vadd.f32 %v1210, %v1256
    %s1259 = sld [smem:[#allocation9 + $0x18b]]
    %v1260 = vstv %s1259
    %v1261 = vmul.f32 %v1260, %v1095
    %v1262 = vmul.f32 %v1260, %v1096
    %v1263 = vadd.f32 %v1215, %v1261
    %v1264 = vadd.f32 %v1216, %v1262
    %s1265 = sld [smem:[#allocation9 + $0x20b]]
    %v1266 = vstv %s1265
    %v1267 = vmul.f32 %v1266, %v1095
    %v1268 = vmul.f32 %v1266, %v1096
    %v1269 = vadd.f32 %v1221, %v1267
    %v1270 = vadd.f32 %v1222, %v1268
    %s1271 = sld [smem:[#allocation9 + $0x28b]]
    %v1272 = vstv %s1271
    %v1273 = vmul.f32 %v1272, %v1095
    %v1274 = vmul.f32 %v1272, %v1096
    %v1275 = vadd.f32 %v1227, %v1273
    %v1276 = vadd.f32 %v1228, %v1274
    %s1277 = sld [smem:[#allocation9 + $0x30b]]
    %v1278 = vstv %s1277
    %v1279 = vmul.f32 %v1278, %v1095
    %v1280 = vmul.f32 %v1278, %v1096
    %v1281 = vadd.f32 %v1233, %v1279
    %v1282 = vadd.f32 %v1234, %v1280
    %s1283 = sld [smem:[#allocation9 + $0x38b]]
    %v1284 = vstv %s1283
    %v1285 = vmul.f32 %v1284, %v1095
    %v1286 = vmul.f32 %v1284, %v1096
    %v1287 = vadd.f32 %v1239, %v1285
    %v1288 = vadd.f32 %v1240, %v1286
    %s1289 = sld [smem:[#allocation10]]
    %v1290 = vstv %s1289
    %v1291 = vadd.f32 %v1245, %v1290
    %v1292 = vadd.f32 %v1246, %v1290
    %1293 = vst.msk [vmem:[#allocation11] sm:$0xff] %vm258, %v1291
    %1294 = vst.msk [vmem:[#allocation11 + $0x8] sm:$0xff] %vm258, %v1292
    %s1295 = sld [smem:[#allocation10 + $0x1]]
    %v1296 = vstv %s1295
    %v1297 = vadd.f32 %v1251, %v1296
    %v1298 = vadd.f32 %v1252, %v1296
    %s1299 = scalar_lea.vmem [#allocation11], 16
    %1300 = vst.msk [vmem:[%s1299] sm:$0xff] %vm258, %v1297
    %1301 = vst.msk [vmem:[%s1299 + $0x8] sm:$0xff] %vm258, %v1298
    %s1302 = sld [smem:[#allocation10 + $0x2]]
    %v1303 = vstv %s1302
    %v1304 = vadd.f32 %v1257, %v1303
    %v1305 = vadd.f32 %v1258, %v1303
    %s1306 = scalar_lea.vmem [#allocation11], 32
    %1307 = vst.msk [vmem:[%s1306] sm:$0xff] %vm258, %v1304
    %1308 = vst.msk [vmem:[%s1306 + $0x8] sm:$0xff] %vm258, %v1305
    %s1309 = sld [smem:[#allocation10 + $0x3]]
    %v1310 = vstv %s1309
    %v1311 = vadd.f32 %v1263, %v1310
    %v1312 = vadd.f32 %v1264, %v1310
    %s1313 = scalar_lea.vmem [#allocation11], 48
    %1314 = vst.msk [vmem:[%s1313] sm:$0xff] %vm258, %v1311
    %1315 = vst.msk [vmem:[%s1313 + $0x8] sm:$0xff] %vm258, %v1312
    %s1316 = sld [smem:[#allocation10 + $0x4]]
    %v1317 = vstv %s1316
    %v1318 = vadd.f32 %v1269, %v1317
    %v1319 = vadd.f32 %v1270, %v1317
    %s1320 = scalar_lea.vmem [#allocation11], 64
    %1321 = vst.msk [vmem:[%s1320] sm:$0xff] %vm258, %v1318
    %1322 = vst.msk [vmem:[%s1320 + $0x8] sm:$0xff] %vm258, %v1319
    %s1323 = sld [smem:[#allocation10 + $0x5]]
    %v1324 = vstv %s1323
    %v1325 = vadd.f32 %v1275, %v1324
    %v1326 = vadd.f32 %v1276, %v1324
    %s1327 = scalar_lea.vmem [#allocation11], 80
    %1328 = vst.msk [vmem:[%s1327] sm:$0xff] %vm258, %v1325
    %1329 = vst.msk [vmem:[%s1327 + $0x8] sm:$0xff] %vm258, %v1326
    %s1330 = sld [smem:[#allocation10 + $0x6]]
    %v1331 = vstv %s1330
    %v1332 = vadd.f32 %v1281, %v1331
    %v1333 = vadd.f32 %v1282, %v1331
    %s1334 = scalar_lea.vmem [#allocation11], 96
    %1335 = vst.msk [vmem:[%s1334] sm:$0xff] %vm258, %v1332
    %1336 = vst.msk [vmem:[%s1334 + $0x8] sm:$0xff] %vm258, %v1333
    %s1337 = sld [smem:[#allocation10 + $0x7]]
    %v1338 = vstv %s1337
    %v1339 = vadd.f32 %v1287, %v1338
    %v1340 = vadd.f32 %v1288, %v1338
    %s1341 = scalar_lea.vmem [#allocation11], 112
    %1342 = vst.msk [vmem:[%s1341] sm:$0xff] %vm258, %v1339
    %1343 = vst.msk [vmem:[%s1341 + $0x8] sm:$0xff] %vm258, %v1340
    // Predicated region
    $region34: #{tpu_custom_call.1} parent=1 // pred_check
      _
    $region35: #{tpu_custom_call.1} parent=1 // pred_check_branch
      %1345 = sbr.rel (0) target = $region37
    $region36: #{tpu_custom_call.1} parent=1 // pred_region
      %s1347 = ssub.s32 2048, 2048
      %1348 = vsyncadd [#allocation4], %s1347
      %s1349 = sshll.u32 [#allocation11], 4
      %s1350 = int_to_ptr.vmem [resolvable:$true] %s1349
      %1355 = dma.vmem_to_hbm [thread:$0]  %s1350, 2048, %s4, [#allocation4], 128, 128, 8
    $region37: #{tpu_custom_call.1} parent=1 // pred_fallthru
      _
    // Predicated region
    $region38: #{tpu_custom_call.1} parent=1 // pred_check
      _
    $region39: #{tpu_custom_call.1} parent=1 // pred_check_branch
      %1357 = sbr.rel (0) target = $region41
    $region40: #{tpu_custom_call.1} parent=1 // pred_region
      %1358 = dma.done [#allocation4], 2048
    $region41: #{tpu_custom_call.1} parent=1 // pred_fallthru
      _
    %1359 = vsyncpa [#allocation3], 1
    %1360 = vsyncpa [#allocation8], 1
    %1361 = vsyncpa [#allocation4], 1
    %1362 = vsyncpa [#allocation5], 1
    %1363 = vsyncpa [#allocation6], 1

</llo_original>
